<compile_context>
chip_gen: v7x
topology: tpu7x:2x2x1
jax: 0.10.0
libtpu: 0.0.40
codegen_flags: <defaults>
</compile_context>

<pallas_src>
import functools

import jax
import jax.numpy as jnp
from jax import lax
from jax.experimental import pallas as pl
from jax.experimental.pallas import tpu as pltpu


def _bilinear_matrix(in_size: int, out_size: int) -> jnp.ndarray:
    """PyTorch F.interpolate(mode='bilinear', align_corners=False) along one axis,
    as a dense (out_size, in_size) matrix."""
    scale = in_size / out_size
    dst = jnp.arange(out_size, dtype=jnp.float32)
    src = (dst + 0.5) * scale - 0.5
    src = jnp.maximum(src, 0.0)                       # PyTorch clamps negatives to 0
    i0 = jnp.minimum(jnp.floor(src).astype(jnp.int32), in_size - 1)
    frac = src - i0.astype(jnp.float32)
    i1 = jnp.minimum(i0 + 1, in_size - 1)
    m = (jax.nn.one_hot(i0, in_size, dtype=jnp.float32) * (1.0 - frac)[:, None]
         + jax.nn.one_hot(i1, in_size, dtype=jnp.float32) * frac[:, None])
    return m


def _onehot_rows(idx, n):
    """(len(idx), n) 0/1 selection matrix; out-of-range indices give zero rows."""
    return (idx[:, None] == jnp.arange(n)[None, :]).astype(jnp.float32)


def make_esa_params(key, esa_channels: int, n_feats: int):
    f = esa_channels
    ks = jax.random.split(key, 10)

    def w(k, shape, scale=0.2):
        return scale * jax.random.normal(k, shape, dtype=jnp.float32)

    return dict(
        w1=w(ks[0], (n_feats, f)),        # 1x1 conv:  (Cin, Cout)
        b1=w(ks[1], (f,), 0.05),
        w2=w(ks[2], (3, 3, f, f)),        # 3x3 s2:    (kh, kw, Cin, Cout)
        b2=w(ks[3], (f,), 0.05),
        w3=w(ks[4], (3, 3, f, f)),        # 3x3 p1
        b3=w(ks[5], (f,), 0.05),
        wf=w(ks[6], (f, f)),
        bf=w(ks[7], (f,), 0.05),
        w4=w(ks[8], (f, n_feats)),
        b4=w(ks[9], (n_feats,), 0.05),
    )


def esa_pallas(x_nchw, params):
    N, C, H, W = x_nchw.shape
    f = params["w1"].shape[1]
    H2, W2 = (H - 3) // 2 + 1, (W - 3) // 2 + 1        # conv2 (stride 2, VALID)
    H3, W3 = (H2 - 7) // 3 + 1, (W2 - 7) // 3 + 1      # max_pool(7, 3)
    assert H2 >= 7 and W2 >= 7, "need conv2 output >= 7 for the 7x7/3 max-pool"

    f32 = jnp.float32
    CW, fW, fW2, fW3 = C * W, f * W, f * W2, f * W3
    hrows, wcols = H2 - 6, fW2 - 6

    w1 = params["w1"].astype(f32)      # (C, f)
    w2 = params["w2"].astype(f32)      # (3, 3, f, f)  (ky, kx, fi, fo)
    w3 = params["w3"].astype(f32)
    wf = params["wf"].astype(f32)      # (f, f)
    w4 = params["w4"].astype(f32)      # (f, C)
    b1 = params["b1"].astype(f32)
    b2 = params["b2"].astype(f32)
    b3 = params["b3"].astype(f32)
    bf = params["bf"].astype(f32)
    b4 = params["b4"].astype(f32)

    eye_w = jnp.eye(W, dtype=f32)

    # ---- conv1 (1x1, C->f) as one weight-folded block matmul ------------------
    #   w1b[c*W + w, fi*W + w'] = w1[c, fi] * (w == w')
    w1b = jnp.einsum("cf,wv->cwfv", w1, eye_w).reshape(CW, fW)
    b1r = jnp.repeat(b1, W)[None, :]

    # ---- conv2 (3x3, s2, VALID): row selections + weight-folded column mixes --
    r2 = jnp.stack([_onehot_rows(2 * jnp.arange(H2) + ky, H) for ky in range(3)])       # (3,H2,H)
    sel2 = jnp.stack([_onehot_rows(2 * jnp.arange(W2) + kx, W).T for kx in range(3)])   # (3,W,W2)
    wc2 = jnp.stack([jnp.einsum("xio,xwv->iwov", w2[ky], sel2).reshape(fW, fW2)
                     for ky in range(3)])                                               # (3,fW,fW2)
    b2r = jnp.repeat(b2, W2)[None, :]

    # ---- max_pool(7,3): stride-3 column subsample (windows never cross blocks) -
    col_idx = (jnp.arange(f)[:, None] * W2 + 3 * jnp.arange(W3)[None, :]).reshape(-1)
    s3w = _onehot_rows(col_idx, wcols).T                                                # (fW2-6,fW3)

    # ---- conv3 (3x3, p1), pool row subsample folded into its left matrices -----
    r3s_list = []
    for ky in range(3):
        src = jnp.arange(H3) + ky - 1
        idx = jnp.where((src >= 0) & (src < H3), 3 * src, -1)
        r3s_list.append(_onehot_rows(idx, hrows))
    r3s = jnp.stack(r3s_list)                                                           # (3,H3,hrows)
    sel3 = jnp.stack([_onehot_rows(jnp.arange(W3) + kx - 1, W3).T for kx in range(3)])  # (3,W3,W3)
    wc3 = jnp.stack([jnp.einsum("xio,xqv->iqov", w3[ky], sel3).reshape(fW3, fW3)
                     for ky in range(3)])                                               # (3,fW3,fW3)
    b3r = jnp.repeat(b3, W3)[None, :]

    # ---- separable bilinear upsample; fuse its column step and conv_f with conv4
    my = _bilinear_matrix(H3, H)                                                        # (H, H3)
    mx = _bilinear_matrix(W3, W)                                                        # (W, W3)
    mxb4 = jnp.einsum("fc,wq->fqcw", w4, mx).reshape(fW3, CW)        # (col-upsample) o conv4
    wf4b = jnp.einsum("fc,wv->fwcv", wf @ w4, eye_w).reshape(fW, CW)  # conv_f o conv4
    b4r = jnp.repeat(bf @ w4 + b4, W)[None, :]

    consts = [w1b, b1r, r2, wc2, b2r, s3w, r3s, wc3, b3r, my, mxb4, wf4b, b4r]

    def kernel(x_ref, w1b_ref, b1_ref, r2_ref, wc2_ref, b2_ref, s3w_ref,
               r3s_ref, wc3_ref, b3_ref, my_ref, mxb4_ref, wf4b_ref, b4_ref, o_ref):
        dot = lambda a, b: jnp.dot(a, b, preferred_element_type=jnp.float32)

        # conv1 (1x1): single MXU matmul over the channel-stacked slab
        c1 = dot(x_ref[...], w1b_ref[...]) + b1_ref[...]                 # (H, fW)

        # conv2 (3x3, stride 2, VALID): 3 left selection dots + 3 weight-folded right dots
        c2 = dot(dot(r2_ref[0], c1), wc2_ref[0])
        c2 = c2 + dot(dot(r2_ref[1], c1), wc2_ref[1])
        c2 = c2 + dot(dot(r2_ref[2], c1), wc2_ref[2])
        c2 = c2 + b2_ref[...]                                            # (H2, fW2)

        # max_pool2d(7, stride 3)
        mw = c2[:, 0:wcols]
        for j in range(1, 7):
            mw = jnp.maximum(mw, c2[:, j:j + wcols])                     # (H2, fW2-6)
        pw = dot(mw, s3w_ref[...])                                       # (H2, fW3)
        mh = pw[0:hrows, :]
        for i in range(1, 7):
            mh = jnp.maximum(mh, pw[i:i + hrows, :])                     # (hrows, fW3)

        # conv3 (3x3, pad 1) with the pool's stride-3 row subsample folded in
        c3 = dot(dot(r3s_ref[0], mh), wc3_ref[0])
        c3 = c3 + dot(dot(r3s_ref[1], mh), wc3_ref[1])
        c3 = c3 + dot(dot(r3s_ref[2], mh), wc3_ref[2])
        c3 = c3 + b3_ref[...]                                            # (H3, fW3)

        # bilinear row upsample, then fused (col-upsample o conv4) + (conv_f o conv4)
        u = dot(my_ref[...], c3)                                         # (H, fW3)
        c4 = dot(u, mxb4_ref[...]) + dot(c1, wf4b_ref[...]) + b4_ref[...]  # (H, CW)

        # sigmoid gate; x re-read from its VMEM ref at the point of use
        o_ref[...] = (x_ref[...] * jax.nn.sigmoid(c4)).astype(o_ref.dtype)

    def const_spec(a):
        if a.ndim == 2:
            return pl.BlockSpec(a.shape, lambda n: (0, 0))
        return pl.BlockSpec(a.shape, lambda n: (0, 0, 0))

    # wrapper-side relayout to the lane-dense channel-stacked slab (N, H, C*W)
    x_st = jnp.transpose(x_nchw.astype(f32), (0, 2, 1, 3)).reshape(N, H, CW)

    out_st = pl.pallas_call(
        kernel,
        out_shape=jax.ShapeDtypeStruct((N, H, CW), f32),
        grid=(N,),
        in_specs=[pl.BlockSpec((None, H, CW), lambda n: (n, 0, 0))]
                 + [const_spec(a) for a in consts],
        out_specs=pl.BlockSpec((None, H, CW), lambda n: (n, 0, 0)),
        compiler_params=pltpu.CompilerParams(
            dimension_semantics=("parallel",),
            vmem_limit_bytes=32 * 1024 * 1024),
    )(x_st, *consts)

    return jnp.transpose(out_st.reshape(N, H, C, W), (0, 2, 1, 3))


def esa_reference(x_nchw, p):
    """Pure-JAX reference with identical (PyTorch) semantics, for validation."""
    prec = lax.Precision.HIGHEST
    x = jnp.transpose(x_nchw, (0, 2, 3, 1)).astype(jnp.float32)     # NHWC
    N, H, W, C = x.shape
    f = p["w1"].shape[1]
    dn = ("NHWC", "HWIO", "NHWC")
    conv = functools.partial(lax.conv_general_dilated,
                             dimension_numbers=dn, precision=prec)
    c1_ = conv(x, p["w1"].reshape(1, 1, C, f), (1, 1), "VALID") + p["b1"].reshape(1, 1, 1, f)
    c1 = conv(c1_, p["w2"], (2, 2), "VALID") + p["b2"].reshape(1, 1, 1, f)
    v = lax.reduce_window(c1, -jnp.inf, lax.max, (1, 7, 7, 1), (1, 3, 3, 1), "VALID")
    c3 = conv(v, p["w3"], (1, 1), ((1, 1), (1, 1))) + p["b3"].reshape(1, 1, 1, f)
    H3, W3 = c3.shape[1], c3.shape[2]
    My = _bilinear_matrix(H3, H)
    Mx = _bilinear_matrix(W3, W)
    c3_up = jnp.einsum("hp,npqf,wq->nhwf", My, c3, Mx, precision=prec)
    cf = jnp.einsum("nhwc,cf->nhwf", c1_, p["wf"], precision=prec) + p["bf"].reshape(1, 1, 1, f)
    c4 = jnp.einsum("nhwf,fc->nhwc", c3_up + cf, p["w4"], precision=prec) + p["b4"].reshape(1, 1, 1, C)
    out = x * jax.nn.sigmoid(c4)
    return jnp.transpose(out, (0, 3, 1, 2))


if __name__ == "__main__":
    key = jax.random.PRNGKey(0)
    kx, kp = jax.random.split(key)

    N, n_feats, H, W = 2, 8, 24, 24
    esa_channels = 4

    x = jax.random.normal(kx, (N, n_feats, H, W), dtype=jnp.float32)
    params = make_esa_params(kp, esa_channels, n_feats)

    out = jax.block_until_ready(esa_pallas(x, params))
    ref = jax.block_until_ready(esa_reference(x, params))

    assert out.shape == x.shape and out.dtype == jnp.float32
    assert bool(jnp.all(jnp.isfinite(out)))
    # In-kernel dots use default (bf16-pass) MXU precision along a chain of
    # ~10 matmuls (reference is f32 HIGHEST), so allow 3e-2 abs.
    max_err = float(jnp.max(jnp.abs(out - ref)))
    if max_err > 3e-2:
        raise SystemExit(f"FAILED: max abs err = {max_err}")
    print("KERNEL_OK")
</pallas_src>

<mosaic_0001>
module attributes {stable_mosaic.version = 11 : i64} {
  func.func @kernel(%arg0: i32, %arg1: memref<1x24x192xf32, #tpu.memory_space<vmem>>, %arg2: memref<192x96xf32, #tpu.memory_space<vmem>>, %arg3: memref<1x96xf32, #tpu.memory_space<vmem>>, %arg4: memref<3x11x24xf32, #tpu.memory_space<vmem>>, %arg5: memref<3x96x44xf32, #tpu.memory_space<vmem>>, %arg6: memref<1x44xf32, #tpu.memory_space<vmem>>, %arg7: memref<38x8xf32, #tpu.memory_space<vmem>>, %arg8: memref<3x2x5xf32, #tpu.memory_space<vmem>>, %arg9: memref<3x8x8xf32, #tpu.memory_space<vmem>>, %arg10: memref<1x8xf32, #tpu.memory_space<vmem>>, %arg11: memref<24x2xf32, #tpu.memory_space<vmem>>, %arg12: memref<8x192xf32, #tpu.memory_space<vmem>>, %arg13: memref<96x192xf32, #tpu.memory_space<vmem>>, %arg14: memref<1x192xf32, #tpu.memory_space<vmem>>, %arg15: memref<1x24x192xf32, #tpu.memory_space<vmem>>) attributes {dimension_semantics = [#tpu.dimension_semantics<parallel>], iteration_bounds = array<i64: 2>, scalar_prefetch = 0 : i64, scratch_operands = 0 : i64, tpu.core_type = #tpu.core_type<tc>, window_params = [{transform_indices = @transform_0, window_bounds = array<i64: 1, 24, 192>}, {pipeline_mode = #tpu.pipeline_mode<synchronous>, transform_indices = @transform_1, window_bounds = array<i64: 192, 96>}, {pipeline_mode = #tpu.pipeline_mode<synchronous>, transform_indices = @transform_2, window_bounds = array<i64: 1, 96>}, {pipeline_mode = #tpu.pipeline_mode<synchronous>, transform_indices = @transform_3, window_bounds = array<i64: 3, 11, 24>}, {pipeline_mode = #tpu.pipeline_mode<synchronous>, transform_indices = @transform_4, window_bounds = array<i64: 3, 96, 44>}, {pipeline_mode = #tpu.pipeline_mode<synchronous>, transform_indices = @transform_5, window_bounds = array<i64: 1, 44>}, {pipeline_mode = #tpu.pipeline_mode<synchronous>, transform_indices = @transform_6, window_bounds = array<i64: 38, 8>}, {pipeline_mode = #tpu.pipeline_mode<synchronous>, transform_indices = @transform_7, window_bounds = array<i64: 3, 2, 5>}, {pipeline_mode = #tpu.pipeline_mode<synchronous>, transform_indices = @transform_8, window_bounds = array<i64: 3, 8, 8>}, {pipeline_mode = #tpu.pipeline_mode<synchronous>, transform_indices = @transform_9, window_bounds = array<i64: 1, 8>}, {pipeline_mode = #tpu.pipeline_mode<synchronous>, transform_indices = @transform_10, window_bounds = array<i64: 24, 2>}, {pipeline_mode = #tpu.pipeline_mode<synchronous>, transform_indices = @transform_11, window_bounds = array<i64: 8, 192>}, {pipeline_mode = #tpu.pipeline_mode<synchronous>, transform_indices = @transform_12, window_bounds = array<i64: 96, 192>}, {pipeline_mode = #tpu.pipeline_mode<synchronous>, transform_indices = @transform_13, window_bounds = array<i64: 1, 192>}, {transform_indices = @transform_14, window_bounds = array<i64: 1, 24, 192>}]} {
    %c0 = arith.constant 0 : index
    %c0_0 = arith.constant 0 : index
    %c0_1 = arith.constant 0 : index
    %0 = vector.load %arg1[%c0, %c0_0, %c0_1] : memref<1x24x192xf32, #tpu.memory_space<vmem>>, vector<1x24x192xf32>
    %1 = vector.shape_cast %0 : vector<1x24x192xf32> to vector<24x192xf32>
    %c0_2 = arith.constant 0 : index
    %c0_3 = arith.constant 0 : index
    %2 = vector.load %arg2[%c0_2, %c0_3] : memref<192x96xf32, #tpu.memory_space<vmem>>, vector<192x96xf32>
    %cst = arith.constant dense<0.000000e+00> : vector<24x96xf32>
    %3 = tpu.matmul %1, %2, %cst {dimension_numbers = #tpu.dot_dimension_numbers<[1], [0], [0], [1], [0, 0, 1, 1], [], []>} : vector<24x192xf32>, vector<192x96xf32>, vector<24x96xf32> -> vector<24x96xf32>
    %c0_4 = arith.constant 0 : index
    %c0_5 = arith.constant 0 : index
    %4 = vector.load %arg3[%c0_4, %c0_5] : memref<1x96xf32, #tpu.memory_space<vmem>>, vector<1x96xf32>
    %5 = vector.broadcast %4 : vector<1x96xf32> to vector<24x96xf32>
    %6 = arith.addf %3, %5 : vector<24x96xf32>
    %c0_6 = arith.constant 0 : index
    %c0_7 = arith.constant 0 : index
    %c0_8 = arith.constant 0 : index
    %7 = vector.load %arg4[%c0_6, %c0_7, %c0_8] : memref<3x11x24xf32, #tpu.memory_space<vmem>>, vector<1x11x24xf32>
    %8 = vector.shape_cast %7 : vector<1x11x24xf32> to vector<11x24xf32>
    %cst_9 = arith.constant dense<0.000000e+00> : vector<11x96xf32>
    %9 = tpu.matmul %8, %6, %cst_9 {dimension_numbers = #tpu.dot_dimension_numbers<[1], [0], [0], [1], [0, 0, 1, 1], [], []>} : vector<11x24xf32>, vector<24x96xf32>, vector<11x96xf32> -> vector<11x96xf32>
    %c0_10 = arith.constant 0 : index
    %c0_11 = arith.constant 0 : index
    %c0_12 = arith.constant 0 : index
    %10 = vector.load %arg5[%c0_10, %c0_11, %c0_12] : memref<3x96x44xf32, #tpu.memory_space<vmem>>, vector<1x96x44xf32>
    %11 = vector.shape_cast %10 : vector<1x96x44xf32> to vector<96x44xf32>
    %cst_13 = arith.constant dense<0.000000e+00> : vector<11x44xf32>
    %12 = tpu.matmul %9, %11, %cst_13 {dimension_numbers = #tpu.dot_dimension_numbers<[1], [0], [0], [1], [0, 0, 1, 1], [], []>} : vector<11x96xf32>, vector<96x44xf32>, vector<11x44xf32> -> vector<11x44xf32>
    %c1 = arith.constant 1 : index
    %c0_14 = arith.constant 0 : index
    %c0_15 = arith.constant 0 : index
    %13 = vector.load %arg4[%c1, %c0_14, %c0_15] : memref<3x11x24xf32, #tpu.memory_space<vmem>>, vector<1x11x24xf32>
    %14 = vector.shape_cast %13 : vector<1x11x24xf32> to vector<11x24xf32>
    %cst_16 = arith.constant dense<0.000000e+00> : vector<11x96xf32>
    %15 = tpu.matmul %14, %6, %cst_16 {dimension_numbers = #tpu.dot_dimension_numbers<[1], [0], [0], [1], [0, 0, 1, 1], [], []>} : vector<11x24xf32>, vector<24x96xf32>, vector<11x96xf32> -> vector<11x96xf32>
    %c1_17 = arith.constant 1 : index
    %c0_18 = arith.constant 0 : index
    %c0_19 = arith.constant 0 : index
    %16 = vector.load %arg5[%c1_17, %c0_18, %c0_19] : memref<3x96x44xf32, #tpu.memory_space<vmem>>, vector<1x96x44xf32>
    %17 = vector.shape_cast %16 : vector<1x96x44xf32> to vector<96x44xf32>
    %cst_20 = arith.constant dense<0.000000e+00> : vector<11x44xf32>
    %18 = tpu.matmul %15, %17, %cst_20 {dimension_numbers = #tpu.dot_dimension_numbers<[1], [0], [0], [1], [0, 0, 1, 1], [], []>} : vector<11x96xf32>, vector<96x44xf32>, vector<11x44xf32> -> vector<11x44xf32>
    %19 = arith.addf %12, %18 : vector<11x44xf32>
    %c2 = arith.constant 2 : index
    %c0_21 = arith.constant 0 : index
    %c0_22 = arith.constant 0 : index
    %20 = vector.load %arg4[%c2, %c0_21, %c0_22] : memref<3x11x24xf32, #tpu.memory_space<vmem>>, vector<1x11x24xf32>
    %21 = vector.shape_cast %20 : vector<1x11x24xf32> to vector<11x24xf32>
    %cst_23 = arith.constant dense<0.000000e+00> : vector<11x96xf32>
    %22 = tpu.matmul %21, %6, %cst_23 {dimension_numbers = #tpu.dot_dimension_numbers<[1], [0], [0], [1], [0, 0, 1, 1], [], []>} : vector<11x24xf32>, vector<24x96xf32>, vector<11x96xf32> -> vector<11x96xf32>
    %c2_24 = arith.constant 2 : index
    %c0_25 = arith.constant 0 : index
    %c0_26 = arith.constant 0 : index
    %23 = vector.load %arg5[%c2_24, %c0_25, %c0_26] : memref<3x96x44xf32, #tpu.memory_space<vmem>>, vector<1x96x44xf32>
    %24 = vector.shape_cast %23 : vector<1x96x44xf32> to vector<96x44xf32>
    %cst_27 = arith.constant dense<0.000000e+00> : vector<11x44xf32>
    %25 = tpu.matmul %22, %24, %cst_27 {dimension_numbers = #tpu.dot_dimension_numbers<[1], [0], [0], [1], [0, 0, 1, 1], [], []>} : vector<11x96xf32>, vector<96x44xf32>, vector<11x44xf32> -> vector<11x44xf32>
    %26 = arith.addf %19, %25 : vector<11x44xf32>
    %c0_28 = arith.constant 0 : index
    %c0_29 = arith.constant 0 : index
    %27 = vector.load %arg6[%c0_28, %c0_29] : memref<1x44xf32, #tpu.memory_space<vmem>>, vector<1x44xf32>
    %28 = vector.broadcast %27 : vector<1x44xf32> to vector<11x44xf32>
    %29 = arith.addf %26, %28 : vector<11x44xf32>
    %30 = vector.extract_strided_slice %29 {offsets = [0, 0], sizes = [11, 38], strides = [1, 1]} : vector<11x44xf32> to vector<11x38xf32>
    %31 = vector.extract_strided_slice %29 {offsets = [0, 1], sizes = [11, 38], strides = [1, 1]} : vector<11x44xf32> to vector<11x38xf32>
    %32 = arith.maximumf %30, %31 : vector<11x38xf32>
    %33 = vector.extract_strided_slice %29 {offsets = [0, 2], sizes = [11, 38], strides = [1, 1]} : vector<11x44xf32> to vector<11x38xf32>
    %34 = arith.maximumf %32, %33 : vector<11x38xf32>
    %35 = vector.extract_strided_slice %29 {offsets = [0, 3], sizes = [11, 38], strides = [1, 1]} : vector<11x44xf32> to vector<11x38xf32>
    %36 = arith.maximumf %34, %35 : vector<11x38xf32>
    %37 = vector.extract_strided_slice %29 {offsets = [0, 4], sizes = [11, 38], strides = [1, 1]} : vector<11x44xf32> to vector<11x38xf32>
    %38 = arith.maximumf %36, %37 : vector<11x38xf32>
    %39 = vector.extract_strided_slice %29 {offsets = [0, 5], sizes = [11, 38], strides = [1, 1]} : vector<11x44xf32> to vector<11x38xf32>
    %40 = arith.maximumf %38, %39 : vector<11x38xf32>
    %41 = vector.extract_strided_slice %29 {offsets = [0, 6], sizes = [11, 38], strides = [1, 1]} : vector<11x44xf32> to vector<11x38xf32>
    %42 = arith.maximumf %40, %41 : vector<11x38xf32>
    %c0_30 = arith.constant 0 : index
    %c0_31 = arith.constant 0 : index
    %43 = vector.load %arg7[%c0_30, %c0_31] : memref<38x8xf32, #tpu.memory_space<vmem>>, vector<38x8xf32>
    %cst_32 = arith.constant dense<0.000000e+00> : vector<11x8xf32>
    %44 = tpu.matmul %42, %43, %cst_32 {dimension_numbers = #tpu.dot_dimension_numbers<[1], [0], [0], [1], [0, 0, 1, 1], [], []>} : vector<11x38xf32>, vector<38x8xf32>, vector<11x8xf32> -> vector<11x8xf32>
    %45 = vector.extract_strided_slice %44 {offsets = [0, 0], sizes = [5, 8], strides = [1, 1]} : vector<11x8xf32> to vector<5x8xf32>
    %46 = vector.extract_strided_slice %44 {offsets = [1, 0], sizes = [5, 8], strides = [1, 1]} : vector<11x8xf32> to vector<5x8xf32>
    %47 = arith.maximumf %45, %46 : vector<5x8xf32>
    %48 = vector.extract_strided_slice %44 {offsets = [2, 0], sizes = [5, 8], strides = [1, 1]} : vector<11x8xf32> to vector<5x8xf32>
    %49 = arith.maximumf %47, %48 : vector<5x8xf32>
    %50 = vector.extract_strided_slice %44 {offsets = [3, 0], sizes = [5, 8], strides = [1, 1]} : vector<11x8xf32> to vector<5x8xf32>
    %51 = arith.maximumf %49, %50 : vector<5x8xf32>
    %52 = vector.extract_strided_slice %44 {offsets = [4, 0], sizes = [5, 8], strides = [1, 1]} : vector<11x8xf32> to vector<5x8xf32>
    %53 = arith.maximumf %51, %52 : vector<5x8xf32>
    %54 = vector.extract_strided_slice %44 {offsets = [5, 0], sizes = [5, 8], strides = [1, 1]} : vector<11x8xf32> to vector<5x8xf32>
    %55 = arith.maximumf %53, %54 : vector<5x8xf32>
    %56 = vector.extract_strided_slice %44 {offsets = [6, 0], sizes = [5, 8], strides = [1, 1]} : vector<11x8xf32> to vector<5x8xf32>
    %57 = arith.maximumf %55, %56 : vector<5x8xf32>
    %c0_33 = arith.constant 0 : index
    %c0_34 = arith.constant 0 : index
    %c0_35 = arith.constant 0 : index
    %58 = vector.load %arg8[%c0_33, %c0_34, %c0_35] : memref<3x2x5xf32, #tpu.memory_space<vmem>>, vector<1x2x5xf32>
    %59 = vector.shape_cast %58 : vector<1x2x5xf32> to vector<2x5xf32>
    %cst_36 = arith.constant dense<0.000000e+00> : vector<2x8xf32>
    %60 = tpu.matmul %59, %57, %cst_36 {dimension_numbers = #tpu.dot_dimension_numbers<[1], [0], [0], [1], [0, 0, 1, 1], [], []>} : vector<2x5xf32>, vector<5x8xf32>, vector<2x8xf32> -> vector<2x8xf32>
    %c0_37 = arith.constant 0 : index
    %c0_38 = arith.constant 0 : index
    %c0_39 = arith.constant 0 : index
    %61 = vector.load %arg9[%c0_37, %c0_38, %c0_39] : memref<3x8x8xf32, #tpu.memory_space<vmem>>, vector<1x8x8xf32>
    %62 = vector.shape_cast %61 : vector<1x8x8xf32> to vector<8x8xf32>
    %cst_40 = arith.constant dense<0.000000e+00> : vector<2x8xf32>
    %63 = tpu.matmul %60, %62, %cst_40 {dimension_numbers = #tpu.dot_dimension_numbers<[1], [0], [0], [1], [0, 0, 1, 1], [], []>} : vector<2x8xf32>, vector<8x8xf32>, vector<2x8xf32> -> vector<2x8xf32>
    %c1_41 = arith.constant 1 : index
    %c0_42 = arith.constant 0 : index
    %c0_43 = arith.constant 0 : index
    %64 = vector.load %arg8[%c1_41, %c0_42, %c0_43] : memref<3x2x5xf32, #tpu.memory_space<vmem>>, vector<1x2x5xf32>
    %65 = vector.shape_cast %64 : vector<1x2x5xf32> to vector<2x5xf32>
    %cst_44 = arith.constant dense<0.000000e+00> : vector<2x8xf32>
    %66 = tpu.matmul %65, %57, %cst_44 {dimension_numbers = #tpu.dot_dimension_numbers<[1], [0], [0], [1], [0, 0, 1, 1], [], []>} : vector<2x5xf32>, vector<5x8xf32>, vector<2x8xf32> -> vector<2x8xf32>
    %c1_45 = arith.constant 1 : index
    %c0_46 = arith.constant 0 : index
    %c0_47 = arith.constant 0 : index
    %67 = vector.load %arg9[%c1_45, %c0_46, %c0_47] : memref<3x8x8xf32, #tpu.memory_space<vmem>>, vector<1x8x8xf32>
    %68 = vector.shape_cast %67 : vector<1x8x8xf32> to vector<8x8xf32>
    %cst_48 = arith.constant dense<0.000000e+00> : vector<2x8xf32>
    %69 = tpu.matmul %66, %68, %cst_48 {dimension_numbers = #tpu.dot_dimension_numbers<[1], [0], [0], [1], [0, 0, 1, 1], [], []>} : vector<2x8xf32>, vector<8x8xf32>, vector<2x8xf32> -> vector<2x8xf32>
    %70 = arith.addf %63, %69 : vector<2x8xf32>
    %c2_49 = arith.constant 2 : index
    %c0_50 = arith.constant 0 : index
    %c0_51 = arith.constant 0 : index
    %71 = vector.load %arg8[%c2_49, %c0_50, %c0_51] : memref<3x2x5xf32, #tpu.memory_space<vmem>>, vector<1x2x5xf32>
    %72 = vector.shape_cast %71 : vector<1x2x5xf32> to vector<2x5xf32>
    %cst_52 = arith.constant dense<0.000000e+00> : vector<2x8xf32>
    %73 = tpu.matmul %72, %57, %cst_52 {dimension_numbers = #tpu.dot_dimension_numbers<[1], [0], [0], [1], [0, 0, 1, 1], [], []>} : vector<2x5xf32>, vector<5x8xf32>, vector<2x8xf32> -> vector<2x8xf32>
    %c2_53 = arith.constant 2 : index
    %c0_54 = arith.constant 0 : index
    %c0_55 = arith.constant 0 : index
    %74 = vector.load %arg9[%c2_53, %c0_54, %c0_55] : memref<3x8x8xf32, #tpu.memory_space<vmem>>, vector<1x8x8xf32>
    %75 = vector.shape_cast %74 : vector<1x8x8xf32> to vector<8x8xf32>
    %cst_56 = arith.constant dense<0.000000e+00> : vector<2x8xf32>
    %76 = tpu.matmul %73, %75, %cst_56 {dimension_numbers = #tpu.dot_dimension_numbers<[1], [0], [0], [1], [0, 0, 1, 1], [], []>} : vector<2x8xf32>, vector<8x8xf32>, vector<2x8xf32> -> vector<2x8xf32>
    %77 = arith.addf %70, %76 : vector<2x8xf32>
    %c0_57 = arith.constant 0 : index
    %c0_58 = arith.constant 0 : index
    %78 = vector.load %arg10[%c0_57, %c0_58] : memref<1x8xf32, #tpu.memory_space<vmem>>, vector<1x8xf32>
    %79 = vector.broadcast %78 : vector<1x8xf32> to vector<2x8xf32>
    %80 = arith.addf %77, %79 : vector<2x8xf32>
    %c0_59 = arith.constant 0 : index
    %c0_60 = arith.constant 0 : index
    %81 = vector.load %arg11[%c0_59, %c0_60] : memref<24x2xf32, #tpu.memory_space<vmem>>, vector<24x2xf32>
    %cst_61 = arith.constant dense<0.000000e+00> : vector<24x8xf32>
    %82 = tpu.matmul %81, %80, %cst_61 {dimension_numbers = #tpu.dot_dimension_numbers<[1], [0], [0], [1], [0, 0, 1, 1], [], []>} : vector<24x2xf32>, vector<2x8xf32>, vector<24x8xf32> -> vector<24x8xf32>
    %c0_62 = arith.constant 0 : index
    %c0_63 = arith.constant 0 : index
    %83 = vector.load %arg12[%c0_62, %c0_63] : memref<8x192xf32, #tpu.memory_space<vmem>>, vector<8x192xf32>
    %cst_64 = arith.constant dense<0.000000e+00> : vector<24x192xf32>
    %84 = tpu.matmul %82, %83, %cst_64 {dimension_numbers = #tpu.dot_dimension_numbers<[1], [0], [0], [1], [0, 0, 1, 1], [], []>} : vector<24x8xf32>, vector<8x192xf32>, vector<24x192xf32> -> vector<24x192xf32>
    %c0_65 = arith.constant 0 : index
    %c0_66 = arith.constant 0 : index
    %85 = vector.load %arg13[%c0_65, %c0_66] : memref<96x192xf32, #tpu.memory_space<vmem>>, vector<96x192xf32>
    %cst_67 = arith.constant dense<0.000000e+00> : vector<24x192xf32>
    %86 = tpu.matmul %6, %85, %cst_67 {dimension_numbers = #tpu.dot_dimension_numbers<[1], [0], [0], [1], [0, 0, 1, 1], [], []>} : vector<24x96xf32>, vector<96x192xf32>, vector<24x192xf32> -> vector<24x192xf32>
    %87 = arith.addf %84, %86 : vector<24x192xf32>
    %c0_68 = arith.constant 0 : index
    %c0_69 = arith.constant 0 : index
    %88 = vector.load %arg14[%c0_68, %c0_69] : memref<1x192xf32, #tpu.memory_space<vmem>>, vector<1x192xf32>
    %89 = vector.broadcast %88 : vector<1x192xf32> to vector<24x192xf32>
    %90 = arith.addf %87, %89 : vector<24x192xf32>
    %c0_70 = arith.constant 0 : index
    %c0_71 = arith.constant 0 : index
    %c0_72 = arith.constant 0 : index
    %91 = vector.load %arg1[%c0_70, %c0_71, %c0_72] : memref<1x24x192xf32, #tpu.memory_space<vmem>>, vector<1x24x192xf32>
    %92 = vector.shape_cast %91 : vector<1x24x192xf32> to vector<24x192xf32>
    %93 = arith.negf %90 : vector<24x192xf32>
    %94 = math.exp %93 : vector<24x192xf32>
    %cst_73 = arith.constant 1.000000e+00 : f32
    %95 = vector.broadcast %cst_73 : f32 to vector<24x192xf32>
    %96 = arith.addf %95, %94 : vector<24x192xf32>
    %97 = arith.divf %95, %96 : vector<24x192xf32>
    %98 = arith.mulf %92, %97 : vector<24x192xf32>
    %c0_74 = arith.constant 0 : index
    %c0_75 = arith.constant 0 : index
    %c0_76 = arith.constant 0 : index
    %99 = vector.load %arg15[%c0_74, %c0_75, %c0_76] : memref<1x24x192xf32, #tpu.memory_space<vmem>>, vector<1x24x192xf32>
    %100 = vector.shape_cast %99 : vector<1x24x192xf32> to vector<24x192xf32>
    %101 = vector.shape_cast %98 : vector<24x192xf32> to vector<1x24x192xf32>
    tpu.vector_store %arg15[%c0_74, %c0_75, %c0_76], %101 {strides = array<i32>} : memref<1x24x192xf32, #tpu.memory_space<vmem>>, vector<1x24x192xf32>,
    return
  }
  func.func @transform_0(%arg0: i32) -> (i32, i32, i32) {
    %c0_i32 = arith.constant 0 : i32
    %c0_i32_0 = arith.constant 0 : i32
    %c0_i32_1 = arith.constant 0 : i32
    return %arg0, %c0_i32, %c0_i32_0 : i32, i32, i32
  }
  func.func @transform_1(%arg0: i32) -> (i32, i32) {
    %c0_i32 = arith.constant 0 : i32
    %c0_i32_0 = arith.constant 0 : i32
    %c0_i32_1 = arith.constant 0 : i32
    return %c0_i32, %c0_i32_0 : i32, i32
  }
  func.func @transform_2(%arg0: i32) -> (i32, i32) {
    %c0_i32 = arith.constant 0 : i32
    %c0_i32_0 = arith.constant 0 : i32
    %c0_i32_1 = arith.constant 0 : i32
    return %c0_i32, %c0_i32_0 : i32, i32
  }
  func.func @transform_3(%arg0: i32) -> (i32, i32, i32) {
    %c0_i32 = arith.constant 0 : i32
    %c0_i32_0 = arith.constant 0 : i32
    %c0_i32_1 = arith.constant 0 : i32
    %c0_i32_2 = arith.constant 0 : i32
    return %c0_i32, %c0_i32_0, %c0_i32_1 : i32, i32, i32
  }
  func.func @transform_4(%arg0: i32) -> (i32, i32, i32) {
    %c0_i32 = arith.constant 0 : i32
    %c0_i32_0 = arith.constant 0 : i32
    %c0_i32_1 = arith.constant 0 : i32
    %c0_i32_2 = arith.constant 0 : i32
    return %c0_i32, %c0_i32_0, %c0_i32_1 : i32, i32, i32
  }
  func.func @transform_5(%arg0: i32) -> (i32, i32) {
    %c0_i32 = arith.constant 0 : i32
    %c0_i32_0 = arith.constant 0 : i32
    %c0_i32_1 = arith.constant 0 : i32
    return %c0_i32, %c0_i32_0 : i32, i32
  }
  func.func @transform_6(%arg0: i32) -> (i32, i32) {
    %c0_i32 = arith.constant 0 : i32
    %c0_i32_0 = arith.constant 0 : i32
    %c0_i32_1 = arith.constant 0 : i32
    return %c0_i32, %c0_i32_0 : i32, i32
  }
  func.func @transform_7(%arg0: i32) -> (i32, i32, i32) {
    %c0_i32 = arith.constant 0 : i32
    %c0_i32_0 = arith.constant 0 : i32
    %c0_i32_1 = arith.constant 0 : i32
    %c0_i32_2 = arith.constant 0 : i32
    return %c0_i32, %c0_i32_0, %c0_i32_1 : i32, i32, i32
  }
  func.func @transform_8(%arg0: i32) -> (i32, i32, i32) {
    %c0_i32 = arith.constant 0 : i32
    %c0_i32_0 = arith.constant 0 : i32
    %c0_i32_1 = arith.constant 0 : i32
    %c0_i32_2 = arith.constant 0 : i32
    return %c0_i32, %c0_i32_0, %c0_i32_1 : i32, i32, i32
  }
  func.func @transform_9(%arg0: i32) -> (i32, i32) {
    %c0_i32 = arith.constant 0 : i32
    %c0_i32_0 = arith.constant 0 : i32
    %c0_i32_1 = arith.constant 0 : i32
    return %c0_i32, %c0_i32_0 : i32, i32
  }
  func.func @transform_10(%arg0: i32) -> (i32, i32) {
    %c0_i32 = arith.constant 0 : i32
    %c0_i32_0 = arith.constant 0 : i32
    %c0_i32_1 = arith.constant 0 : i32
    return %c0_i32, %c0_i32_0 : i32, i32
  }
  func.func @transform_11(%arg0: i32) -> (i32, i32) {
    %c0_i32 = arith.constant 0 : i32
    %c0_i32_0 = arith.constant 0 : i32
    %c0_i32_1 = arith.constant 0 : i32
    return %c0_i32, %c0_i32_0 : i32, i32
  }
  func.func @transform_12(%arg0: i32) -> (i32, i32) {
    %c0_i32 = arith.constant 0 : i32
    %c0_i32_0 = arith.constant 0 : i32
    %c0_i32_1 = arith.constant 0 : i32
    return %c0_i32, %c0_i32_0 : i32, i32
  }
  func.func @transform_13(%arg0: i32) -> (i32, i32) {
    %c0_i32 = arith.constant 0 : i32
    %c0_i32_0 = arith.constant 0 : i32
    %c0_i32_1 = arith.constant 0 : i32
    return %c0_i32, %c0_i32_0 : i32, i32
  }
  func.func @transform_14(%arg0: i32) -> (i32, i32, i32) {
    %c0_i32 = arith.constant 0 : i32
    %c0_i32_0 = arith.constant 0 : i32
    %c0_i32_1 = arith.constant 0 : i32
    return %arg0, %c0_i32, %c0_i32_0 : i32, i32, i32
  }
}

</mosaic_0001>

<llo_original>
// kernel: tpu_custom_call.1
$region0: #{tpu_custom_call.1}
  #allocation0 [shape = 'u32[]', space=smem, size = 0x4, offset = 0x4, fixed_abs, tag = 'smem constant byte address 0x4 - core index']
  #allocation1 [shape = 'u32[144,128]{1,0:T(1,128)}', space=vmem, size = 0x12000, scoped, tag = 'internal scratch']
  %s0 = inlined_call_operand.hbm [shape: f32[2,24,192], index: 0, kind: input, shape index: {}]
  %s1 = inlined_call_operand.vmem [shape: f32[192,96], index: 1, kind: input, shape index: {}]
  %s2 = inlined_call_operand.vmem [shape: f32[1,96], index: 2, kind: input, shape index: {}]
  %s3 = inlined_call_operand.vmem [shape: f32[3,11,24], index: 3, kind: input, shape index: {}]
  %s4 = inlined_call_operand.vmem [shape: f32[3,96,44], index: 4, kind: input, shape index: {}]
  %s5 = inlined_call_operand.vmem [shape: f32[1,44], index: 5, kind: input, shape index: {}]
  %s6 = inlined_call_operand.vmem [shape: f32[38,8], index: 6, kind: input, shape index: {}]
  %s7 = inlined_call_operand.vmem [shape: f32[3,2,5], index: 7, kind: input, shape index: {}]
  %s8 = inlined_call_operand.vmem [shape: f32[3,8,8], index: 8, kind: input, shape index: {}]
  %s9 = inlined_call_operand.vmem [shape: f32[1,8], index: 9, kind: input, shape index: {}]
  %s10 = inlined_call_operand.vmem [shape: f32[24,2], index: 10, kind: input, shape index: {}]
  %s11 = inlined_call_operand.vmem [shape: f32[8,192], index: 11, kind: input, shape index: {}]
  %s12 = inlined_call_operand.vmem [shape: f32[96,192], index: 12, kind: input, shape index: {}]
  %s13 = inlined_call_operand.vmem [shape: f32[1,192], index: 13, kind: input, shape index: {}]
  %s14 = inlined_call_operand.hbm [shape: f32[2,24,192], index: 14, kind: output, shape index: {}]
  %s15 = sld [smem:[#allocation0]]
  $region93: #{tpu_custom_call.1} parent=0
    _
  %s17 = ssub.s32 1, %s15
  %s18 = scalar_select 0, %s17, %s15
  $region1: #{tpu_custom_call.1} parent=0
    #allocation2 [shape = 'u8[49152]{0}', space=vmem, size = 0xc000, scoped, tag = 'input window, operand 0']
    #allocation3 [shape = 's32[2]{0}', space=sflag, size = 0x8, scoped, tag = 'scoped memory for tpu_custom_call.1']
    #allocation4 [shape = 's32[2]{0}', space=sflag, size = 0x8, scoped, tag = 'scoped memory for tpu_custom_call.1']
    #allocation5 [shape = 'u8[49152]{0}', space=vmem, size = 0xc000, scoped, tag = 'output window, operand 0']
    %19 = vsyncpa [#allocation3], 0
    %s20 = scalar_lea.sflag [#allocation3], 1
    %21 = vsyncpa %s20, 0
    %22 = vsyncpa [#allocation4], 0
    %s23 = scalar_lea.sflag [#allocation4], 1
    %24 = vsyncpa %s23, 0
    loop: start=0, step=1, limit=4
    $region2: #{tpu_custom_call.1} parent=1 // loop_pre_header
      _
    $region3: #{tpu_custom_call.1} parent=1 // loop_header
      %s26 = sphi 0, %s30
      %p27 = scmp.ge.s32.totalorder %s26, 4
      %s36 = sphi 0, %s38
      %s39 = sphi 0, %s36
      %s40 = sphi 0, %s39
      %s56 = sphi 0, %s40
      %s60 = sphi 0, %s60
      %s62 = sphi 0, %s60
      %s63 = sphi 0, %s62
      %s77 = sphi 0, %s63
      %s81 = sphi 0, %s81
      %s83 = sphi 0, %s81
      %s84 = sphi 0, %s83
      %s98 = sphi 0, %s84
      %s102 = sphi 0, %s102
      %s104 = sphi 0, %s102
      %s105 = sphi 0, %s104
      %s119 = sphi 0, %s105
      %s123 = sphi 0, %s123
      %s125 = sphi 0, %s123
      %s126 = sphi 0, %s125
      %s140 = sphi 0, %s126
      %s144 = sphi 0, %s144
      %s146 = sphi 0, %s144
      %s147 = sphi 0, %s146
      %s161 = sphi 0, %s147
      %s165 = sphi 0, %s165
      %s167 = sphi 0, %s165
      %s168 = sphi 0, %s167
      %s182 = sphi 0, %s168
      %s186 = sphi 0, %s186
      %s188 = sphi 0, %s186
      %s189 = sphi 0, %s188
      %s203 = sphi 0, %s189
      %s207 = sphi 0, %s207
      %s209 = sphi 0, %s207
      %s210 = sphi 0, %s209
      %s224 = sphi 0, %s210
      %s228 = sphi 0, %s228
      %s230 = sphi 0, %s228
      %s231 = sphi 0, %s230
      %s245 = sphi 0, %s231
      %s249 = sphi 0, %s249
      %s251 = sphi 0, %s249
      %s252 = sphi 0, %s251
      %s266 = sphi 0, %s252
      %s270 = sphi 0, %s270
      %s272 = sphi 0, %s270
      %s273 = sphi 0, %s272
      %s287 = sphi 0, %s273
      %s291 = sphi 0, %s291
      %s293 = sphi 0, %s291
      %s294 = sphi 0, %s293
      %s308 = sphi 0, %s294
      %s312 = sphi 0, %s312
      %s314 = sphi 0, %s312
      %s315 = sphi 0, %s314
      %s329 = sphi 0, %s315
      %s335 = sphi 0, %s337
      %s338 = sphi 0, %s335
      %s339 = sphi 0, %s338
      %s355 = sphi 0, %s339
    $region4: #{tpu_custom_call.1} parent=1 // loop_header_branch
      %29 = sbr.rel (%p27) target = $region8
    $region5: #{tpu_custom_call.1} parent=1 // loop_body
      %s31 = ssub.s32 %s26, 1
      %s32 = ssub.s32 %s26, 2
      %s33 = sadd.s32 %s26, 1
      %s34 = ssub.s32 %s26, %s33
      %p35 = scmp.eq.s32.totalorder %s34, 0
      %s37 = sadd.s32 %s36, 1
      %s38 = scalar_select %p35, %s36, %s37
      %p41 = pneg %p35
      %p42 = scmp.eq.s32.totalorder %s26, 1
      %p43 = por %p41, %p42
      %p44 = scmp.ne.s32.totalorder %s36, %s39
      %p45 = scmp.eq.s32.totalorder %s26, 0
      %p46 = por %p44, %p45
      %p47 = scmp.ne.s32.totalorder %s36, %s39
      %p48 = scmp.eq.s32.totalorder %s31, 1
      %p49 = por %p47, %p48
      %p50 = scmp.ne.s32.totalorder %s39, %s40
      %p51 = scmp.eq.s32.totalorder %s31, 0
      %p52 = por %p50, %p51
      %p53 = scmp.ne.s32.totalorder %s39, %s40
      %p54 = scmp.eq.s32.totalorder %s32, 1
      %p55 = por %p53, %p54
      %p57 = scmp.ne.s32.totalorder %s40, %s56
      %p58 = scmp.eq.s32.totalorder %s32, 0
      %p59 = por %p57, %p58
      %s61 = sadd.s32 %s60, 1
      %p64 = scmp.eq.s32.totalorder %s26, 1
      %p65 = scmp.ne.s32.totalorder %s60, %s62
      %p66 = scmp.eq.s32.totalorder %s26, 0
      %p67 = por %p65, %p66
      %p68 = scmp.ne.s32.totalorder %s60, %s62
      %p69 = scmp.eq.s32.totalorder %s31, 1
      %p70 = por %p68, %p69
      %p71 = scmp.ne.s32.totalorder %s62, %s63
      %p72 = scmp.eq.s32.totalorder %s31, 0
      %p73 = por %p71, %p72
      %p74 = scmp.ne.s32.totalorder %s62, %s63
      %p75 = scmp.eq.s32.totalorder %s32, 1
      %p76 = por %p74, %p75
      %p78 = scmp.ne.s32.totalorder %s63, %s77
      %p79 = scmp.eq.s32.totalorder %s32, 0
      %p80 = por %p78, %p79
      %s82 = sadd.s32 %s81, 1
      %p85 = scmp.eq.s32.totalorder %s26, 1
      %p86 = scmp.ne.s32.totalorder %s81, %s83
      %p87 = scmp.eq.s32.totalorder %s26, 0
      %p88 = por %p86, %p87
      %p89 = scmp.ne.s32.totalorder %s81, %s83
      %p90 = scmp.eq.s32.totalorder %s31, 1
      %p91 = por %p89, %p90
      %p92 = scmp.ne.s32.totalorder %s83, %s84
      %p93 = scmp.eq.s32.totalorder %s31, 0
      %p94 = por %p92, %p93
      %p95 = scmp.ne.s32.totalorder %s83, %s84
      %p96 = scmp.eq.s32.totalorder %s32, 1
      %p97 = por %p95, %p96
      %p99 = scmp.ne.s32.totalorder %s84, %s98
      %p100 = scmp.eq.s32.totalorder %s32, 0
      %p101 = por %p99, %p100
      %s103 = sadd.s32 %s102, 1
      %p106 = scmp.eq.s32.totalorder %s26, 1
      %p107 = scmp.ne.s32.totalorder %s102, %s104
      %p108 = scmp.eq.s32.totalorder %s26, 0
      %p109 = por %p107, %p108
      %p110 = scmp.ne.s32.totalorder %s102, %s104
      %p111 = scmp.eq.s32.totalorder %s31, 1
      %p112 = por %p110, %p111
      %p113 = scmp.ne.s32.totalorder %s104, %s105
      %p114 = scmp.eq.s32.totalorder %s31, 0
      %p115 = por %p113, %p114
      %p116 = scmp.ne.s32.totalorder %s104, %s105
      %p117 = scmp.eq.s32.totalorder %s32, 1
      %p118 = por %p116, %p117
      %p120 = scmp.ne.s32.totalorder %s105, %s119
      %p121 = scmp.eq.s32.totalorder %s32, 0
      %p122 = por %p120, %p121
      %s124 = sadd.s32 %s123, 1
      %p127 = scmp.eq.s32.totalorder %s26, 1
      %p128 = scmp.ne.s32.totalorder %s123, %s125
      %p129 = scmp.eq.s32.totalorder %s26, 0
      %p130 = por %p128, %p129
      %p131 = scmp.ne.s32.totalorder %s123, %s125
      %p132 = scmp.eq.s32.totalorder %s31, 1
      %p133 = por %p131, %p132
      %p134 = scmp.ne.s32.totalorder %s125, %s126
      %p135 = scmp.eq.s32.totalorder %s31, 0
      %p136 = por %p134, %p135
      %p137 = scmp.ne.s32.totalorder %s125, %s126
      %p138 = scmp.eq.s32.totalorder %s32, 1
      %p139 = por %p137, %p138
      %p141 = scmp.ne.s32.totalorder %s126, %s140
      %p142 = scmp.eq.s32.totalorder %s32, 0
      %p143 = por %p141, %p142
      %s145 = sadd.s32 %s144, 1
      %p148 = scmp.eq.s32.totalorder %s26, 1
      %p149 = scmp.ne.s32.totalorder %s144, %s146
      %p150 = scmp.eq.s32.totalorder %s26, 0
      %p151 = por %p149, %p150
      %p152 = scmp.ne.s32.totalorder %s144, %s146
      %p153 = scmp.eq.s32.totalorder %s31, 1
      %p154 = por %p152, %p153
      %p155 = scmp.ne.s32.totalorder %s146, %s147
      %p156 = scmp.eq.s32.totalorder %s31, 0
      %p157 = por %p155, %p156
      %p158 = scmp.ne.s32.totalorder %s146, %s147
      %p159 = scmp.eq.s32.totalorder %s32, 1
      %p160 = por %p158, %p159
      %p162 = scmp.ne.s32.totalorder %s147, %s161
      %p163 = scmp.eq.s32.totalorder %s32, 0
      %p164 = por %p162, %p163
      %s166 = sadd.s32 %s165, 1
      %p169 = scmp.eq.s32.totalorder %s26, 1
      %p170 = scmp.ne.s32.totalorder %s165, %s167
      %p171 = scmp.eq.s32.totalorder %s26, 0
      %p172 = por %p170, %p171
      %p173 = scmp.ne.s32.totalorder %s165, %s167
      %p174 = scmp.eq.s32.totalorder %s31, 1
      %p175 = por %p173, %p174
      %p176 = scmp.ne.s32.totalorder %s167, %s168
      %p177 = scmp.eq.s32.totalorder %s31, 0
      %p178 = por %p176, %p177
      %p179 = scmp.ne.s32.totalorder %s167, %s168
      %p180 = scmp.eq.s32.totalorder %s32, 1
      %p181 = por %p179, %p180
      %p183 = scmp.ne.s32.totalorder %s168, %s182
      %p184 = scmp.eq.s32.totalorder %s32, 0
      %p185 = por %p183, %p184
      %s187 = sadd.s32 %s186, 1
      %p190 = scmp.eq.s32.totalorder %s26, 1
      %p191 = scmp.ne.s32.totalorder %s186, %s188
      %p192 = scmp.eq.s32.totalorder %s26, 0
      %p193 = por %p191, %p192
      %p194 = scmp.ne.s32.totalorder %s186, %s188
      %p195 = scmp.eq.s32.totalorder %s31, 1
      %p196 = por %p194, %p195
      %p197 = scmp.ne.s32.totalorder %s188, %s189
      %p198 = scmp.eq.s32.totalorder %s31, 0
      %p199 = por %p197, %p198
      %p200 = scmp.ne.s32.totalorder %s188, %s189
      %p201 = scmp.eq.s32.totalorder %s32, 1
      %p202 = por %p200, %p201
      %p204 = scmp.ne.s32.totalorder %s189, %s203
      %p205 = scmp.eq.s32.totalorder %s32, 0
      %p206 = por %p204, %p205
      %s208 = sadd.s32 %s207, 1
      %p211 = scmp.eq.s32.totalorder %s26, 1
      %p212 = scmp.ne.s32.totalorder %s207, %s209
      %p213 = scmp.eq.s32.totalorder %s26, 0
      %p214 = por %p212, %p213
      %p215 = scmp.ne.s32.totalorder %s207, %s209
      %p216 = scmp.eq.s32.totalorder %s31, 1
      %p217 = por %p215, %p216
      %p218 = scmp.ne.s32.totalorder %s209, %s210
      %p219 = scmp.eq.s32.totalorder %s31, 0
      %p220 = por %p218, %p219
      %p221 = scmp.ne.s32.totalorder %s209, %s210
      %p222 = scmp.eq.s32.totalorder %s32, 1
      %p223 = por %p221, %p222
      %p225 = scmp.ne.s32.totalorder %s210, %s224
      %p226 = scmp.eq.s32.totalorder %s32, 0
      %p227 = por %p225, %p226
      %s229 = sadd.s32 %s228, 1
      %p232 = scmp.eq.s32.totalorder %s26, 1
      %p233 = scmp.ne.s32.totalorder %s228, %s230
      %p234 = scmp.eq.s32.totalorder %s26, 0
      %p235 = por %p233, %p234
      %p236 = scmp.ne.s32.totalorder %s228, %s230
      %p237 = scmp.eq.s32.totalorder %s31, 1
      %p238 = por %p236, %p237
      %p239 = scmp.ne.s32.totalorder %s230, %s231
      %p240 = scmp.eq.s32.totalorder %s31, 0
      %p241 = por %p239, %p240
      %p242 = scmp.ne.s32.totalorder %s230, %s231
      %p243 = scmp.eq.s32.totalorder %s32, 1
      %p244 = por %p242, %p243
      %p246 = scmp.ne.s32.totalorder %s231, %s245
      %p247 = scmp.eq.s32.totalorder %s32, 0
      %p248 = por %p246, %p247
      %s250 = sadd.s32 %s249, 1
      %p253 = scmp.eq.s32.totalorder %s26, 1
      %p254 = scmp.ne.s32.totalorder %s249, %s251
      %p255 = scmp.eq.s32.totalorder %s26, 0
      %p256 = por %p254, %p255
      %p257 = scmp.ne.s32.totalorder %s249, %s251
      %p258 = scmp.eq.s32.totalorder %s31, 1
      %p259 = por %p257, %p258
      %p260 = scmp.ne.s32.totalorder %s251, %s252
      %p261 = scmp.eq.s32.totalorder %s31, 0
      %p262 = por %p260, %p261
      %p263 = scmp.ne.s32.totalorder %s251, %s252
      %p264 = scmp.eq.s32.totalorder %s32, 1
      %p265 = por %p263, %p264
      %p267 = scmp.ne.s32.totalorder %s252, %s266
      %p268 = scmp.eq.s32.totalorder %s32, 0
      %p269 = por %p267, %p268
      %s271 = sadd.s32 %s270, 1
      %p274 = scmp.eq.s32.totalorder %s26, 1
      %p275 = scmp.ne.s32.totalorder %s270, %s272
      %p276 = scmp.eq.s32.totalorder %s26, 0
      %p277 = por %p275, %p276
      %p278 = scmp.ne.s32.totalorder %s270, %s272
      %p279 = scmp.eq.s32.totalorder %s31, 1
      %p280 = por %p278, %p279
      %p281 = scmp.ne.s32.totalorder %s272, %s273
      %p282 = scmp.eq.s32.totalorder %s31, 0
      %p283 = por %p281, %p282
      %p284 = scmp.ne.s32.totalorder %s272, %s273
      %p285 = scmp.eq.s32.totalorder %s32, 1
      %p286 = por %p284, %p285
      %p288 = scmp.ne.s32.totalorder %s273, %s287
      %p289 = scmp.eq.s32.totalorder %s32, 0
      %p290 = por %p288, %p289
      %s292 = sadd.s32 %s291, 1
      %p295 = scmp.eq.s32.totalorder %s26, 1
      %p296 = scmp.ne.s32.totalorder %s291, %s293
      %p297 = scmp.eq.s32.totalorder %s26, 0
      %p298 = por %p296, %p297
      %p299 = scmp.ne.s32.totalorder %s291, %s293
      %p300 = scmp.eq.s32.totalorder %s31, 1
      %p301 = por %p299, %p300
      %p302 = scmp.ne.s32.totalorder %s293, %s294
      %p303 = scmp.eq.s32.totalorder %s31, 0
      %p304 = por %p302, %p303
      %p305 = scmp.ne.s32.totalorder %s293, %s294
      %p306 = scmp.eq.s32.totalorder %s32, 1
      %p307 = por %p305, %p306
      %p309 = scmp.ne.s32.totalorder %s294, %s308
      %p310 = scmp.eq.s32.totalorder %s32, 0
      %p311 = por %p309, %p310
      %s313 = sadd.s32 %s312, 1
      %p316 = scmp.eq.s32.totalorder %s26, 1
      %p317 = scmp.ne.s32.totalorder %s312, %s314
      %p318 = scmp.eq.s32.totalorder %s26, 0
      %p319 = por %p317, %p318
      %p320 = scmp.ne.s32.totalorder %s312, %s314
      %p321 = scmp.eq.s32.totalorder %s31, 1
      %p322 = por %p320, %p321
      %p323 = scmp.ne.s32.totalorder %s314, %s315
      %p324 = scmp.eq.s32.totalorder %s31, 0
      %p325 = por %p323, %p324
      %p326 = scmp.ne.s32.totalorder %s314, %s315
      %p327 = scmp.eq.s32.totalorder %s32, 1
      %p328 = por %p326, %p327
      %p330 = scmp.ne.s32.totalorder %s315, %s329
      %p331 = scmp.eq.s32.totalorder %s32, 0
      %p332 = por %p330, %p331
      %s333 = ssub.s32 %s26, %s33
      %p334 = scmp.eq.s32.totalorder %s333, 0
      %s336 = sadd.s32 %s335, 1
      %s337 = scalar_select %p334, %s335, %s336
      %p340 = pneg %p334
      %p341 = scmp.eq.s32.totalorder %s26, 1
      %p342 = por %p340, %p341
      %p343 = scmp.ne.s32.totalorder %s335, %s338
      %p344 = scmp.eq.s32.totalorder %s26, 0
      %p345 = por %p343, %p344
      %p346 = scmp.ne.s32.totalorder %s335, %s338
      %p347 = scmp.eq.s32.totalorder %s31, 1
      %p348 = por %p346, %p347
      %p349 = scmp.ne.s32.totalorder %s338, %s339
      %p350 = scmp.eq.s32.totalorder %s31, 0
      %p351 = por %p349, %p350
      %p352 = scmp.ne.s32.totalorder %s338, %s339
      %p353 = scmp.eq.s32.totalorder %s32, 1
      %p354 = por %p352, %p353
      %p356 = scmp.ne.s32.totalorder %s339, %s355
      %p357 = scmp.eq.s32.totalorder %s32, 0
      %p358 = por %p356, %p357
      %p359 = scmp.le.s32.totalorder 1, %s26
      %p360 = scmp.lt.s32.totalorder %s26, 3
      %p361 = pnand %p359, %p360
      %p362 = pneg %p361
      // Predicated region
      $region9: #{tpu_custom_call.1} parent=5 // pred_check
        _
      $region10: #{tpu_custom_call.1} parent=5 // pred_check_branch
        %364 = sbr.rel (%p361) target = $region12
      $region11: #{tpu_custom_call.1} parent=5 // pred_region
        %s365 = ssub.s32 %s26, 1
        // Predicated region
        $region13: #{tpu_custom_call.1} parent=11 // pred_check
          %p366 = pneg %p73
        $region14: #{tpu_custom_call.1} parent=11 // pred_check_branch
          %368 = sbr.rel (%p366) target = $region16
        $region15: #{tpu_custom_call.1} parent=11 // pred_region
          _
        $region16: #{tpu_custom_call.1} parent=11 // pred_fallthru
          _
        // Predicated region
        $region17: #{tpu_custom_call.1} parent=11 // pred_check
          %p369 = pneg %p94
        $region18: #{tpu_custom_call.1} parent=11 // pred_check_branch
          %371 = sbr.rel (%p369) target = $region20
        $region19: #{tpu_custom_call.1} parent=11 // pred_region
          _
        $region20: #{tpu_custom_call.1} parent=11 // pred_fallthru
          _
        // Predicated region
        $region21: #{tpu_custom_call.1} parent=11 // pred_check
          %p372 = pneg %p115
        $region22: #{tpu_custom_call.1} parent=11 // pred_check_branch
          %374 = sbr.rel (%p372) target = $region24
        $region23: #{tpu_custom_call.1} parent=11 // pred_region
          _
        $region24: #{tpu_custom_call.1} parent=11 // pred_fallthru
          _
        // Predicated region
        $region25: #{tpu_custom_call.1} parent=11 // pred_check
          %p375 = pneg %p136
        $region26: #{tpu_custom_call.1} parent=11 // pred_check_branch
          %377 = sbr.rel (%p375) target = $region28
        $region27: #{tpu_custom_call.1} parent=11 // pred_region
          _
        $region28: #{tpu_custom_call.1} parent=11 // pred_fallthru
          _
        // Predicated region
        $region29: #{tpu_custom_call.1} parent=11 // pred_check
          %p378 = pneg %p157
        $region30: #{tpu_custom_call.1} parent=11 // pred_check_branch
          %380 = sbr.rel (%p378) target = $region32
        $region31: #{tpu_custom_call.1} parent=11 // pred_region
          _
        $region32: #{tpu_custom_call.1} parent=11 // pred_fallthru
          _
        // Predicated region
        $region33: #{tpu_custom_call.1} parent=11 // pred_check
          %p381 = pneg %p178
        $region34: #{tpu_custom_call.1} parent=11 // pred_check_branch
          %383 = sbr.rel (%p381) target = $region36
        $region35: #{tpu_custom_call.1} parent=11 // pred_region
          _
        $region36: #{tpu_custom_call.1} parent=11 // pred_fallthru
          _
        // Predicated region
        $region37: #{tpu_custom_call.1} parent=11 // pred_check
          %p384 = pneg %p199
        $region38: #{tpu_custom_call.1} parent=11 // pred_check_branch
          %386 = sbr.rel (%p384) target = $region40
        $region39: #{tpu_custom_call.1} parent=11 // pred_region
          _
        $region40: #{tpu_custom_call.1} parent=11 // pred_fallthru
          _
        // Predicated region
        $region41: #{tpu_custom_call.1} parent=11 // pred_check
          %p387 = pneg %p220
        $region42: #{tpu_custom_call.1} parent=11 // pred_check_branch
          %389 = sbr.rel (%p387) target = $region44
        $region43: #{tpu_custom_call.1} parent=11 // pred_region
          _
        $region44: #{tpu_custom_call.1} parent=11 // pred_fallthru
          _
        // Predicated region
        $region45: #{tpu_custom_call.1} parent=11 // pred_check
          %p390 = pneg %p241
        $region46: #{tpu_custom_call.1} parent=11 // pred_check_branch
          %392 = sbr.rel (%p390) target = $region48
        $region47: #{tpu_custom_call.1} parent=11 // pred_region
          _
        $region48: #{tpu_custom_call.1} parent=11 // pred_fallthru
          _
        // Predicated region
        $region49: #{tpu_custom_call.1} parent=11 // pred_check
          %p393 = pneg %p262
        $region50: #{tpu_custom_call.1} parent=11 // pred_check_branch
          %395 = sbr.rel (%p393) target = $region52
        $region51: #{tpu_custom_call.1} parent=11 // pred_region
          _
        $region52: #{tpu_custom_call.1} parent=11 // pred_fallthru
          _
        // Predicated region
        $region53: #{tpu_custom_call.1} parent=11 // pred_check
          %p396 = pneg %p283
        $region54: #{tpu_custom_call.1} parent=11 // pred_check_branch
          %398 = sbr.rel (%p396) target = $region56
        $region55: #{tpu_custom_call.1} parent=11 // pred_region
          _
        $region56: #{tpu_custom_call.1} parent=11 // pred_fallthru
          _
        // Predicated region
        $region57: #{tpu_custom_call.1} parent=11 // pred_check
          %p399 = pneg %p304
        $region58: #{tpu_custom_call.1} parent=11 // pred_check_branch
          %401 = sbr.rel (%p399) target = $region60
        $region59: #{tpu_custom_call.1} parent=11 // pred_region
          _
        $region60: #{tpu_custom_call.1} parent=11 // pred_fallthru
          _
        // Predicated region
        $region61: #{tpu_custom_call.1} parent=11 // pred_check
          %p402 = pneg %p325
        $region62: #{tpu_custom_call.1} parent=11 // pred_check_branch
          %404 = sbr.rel (%p402) target = $region64
        $region63: #{tpu_custom_call.1} parent=11 // pred_region
          _
        $region64: #{tpu_custom_call.1} parent=11 // pred_fallthru
          _
      $region12: #{tpu_custom_call.1} parent=5 // pred_fallthru
        _
      %p405 = scmp.lt.s32.totalorder %s26, 2
      // Predicated region
      $region65: #{tpu_custom_call.1} parent=5 // pred_check
        %p406 = pneg %p405
      $region66: #{tpu_custom_call.1} parent=5 // pred_check_branch
        %408 = sbr.rel (%p406) target = $region68
      $region67: #{tpu_custom_call.1} parent=5 // pred_region
        // Predicated region
        $region69: #{tpu_custom_call.1} parent=67 // pred_check
          %p409 = pneg %p46
        $region70: #{tpu_custom_call.1} parent=67 // pred_check_branch
          %411 = sbr.rel (%p409) target = $region72
        $region71: #{tpu_custom_call.1} parent=67 // pred_region
          %s412 = sand.u32 %s36, 1
          %s413 = scalar_lea.sflag [#allocation3], %s412
          %s414 = sand.u32 %s36, 1
          %s415 = smul.addr %s414, 48
          %s416 = scalar_lea.vmem [#allocation2], %s415
          %s418 = ssub.s32 768, 768
          %419 = vsyncadd %s413, %s418
          %s420 = smul.addr %s26, 6
          %s421 = smul.addr %s420, 128
          %s422 = scalar_lea.hbm %s0, %s421
          %s423 = sshll.u32 %s416, 4
          %s424 = int_to_ptr.vmem [resolvable:$true] %s423
          %429 = dma.hbm_to_vmem [thread:$0]  %s422, 768, %s424, %s413, 256, 256, 16
        $region72: #{tpu_custom_call.1} parent=67 // pred_fallthru
          _
      $region68: #{tpu_custom_call.1} parent=5 // pred_fallthru
        _
      %p430 = scmp.le.s32.totalorder 1, %s26
      %p431 = scmp.lt.s32.totalorder %s26, 3
      %p432 = pnand %p430, %p431
      %p433 = pneg %p432
      // Predicated region
      $region73: #{tpu_custom_call.1} parent=5 // pred_check
        _
      $region74: #{tpu_custom_call.1} parent=5 // pred_check_branch
        %435 = sbr.rel (%p432) target = $region76
      $region75: #{tpu_custom_call.1} parent=5 // pred_region
        %s436 = ssub.s32 %s26, 1
        %s437 = sand.u32 %s39, 1
        %s438 = scalar_lea.sflag [#allocation3], %s437
        %s439 = sand.u32 %s39, 1
        %s440 = smul.addr %s439, 48
        %s441 = scalar_lea.vmem [#allocation2], %s440
        // Predicated region
        $region77: #{tpu_custom_call.1} parent=75 // pred_check
          %p442 = pneg %p52
        $region78: #{tpu_custom_call.1} parent=75 // pred_check_branch
          %444 = sbr.rel (%p442) target = $region80
        $region79: #{tpu_custom_call.1} parent=75 // pred_region
          %445 = dma.done %s438, 768
        $region80: #{tpu_custom_call.1} parent=75 // pred_fallthru
          _
        %s446 = sand.u32 %s39, 1
        %s447 = scalar_lea.sflag [#allocation3], %s446
        %s448 = sand.u32 %s39, 1
        %s449 = smul.addr %s448, 48
        %s450 = scalar_lea.vmem [#allocation2], %s449
        %p451 = pneg %p52
        %p452 = pneg %p49
        %p453 = pneg %p73
        %p454 = pneg %p70
        %p455 = pneg %p94
        %p456 = pneg %p91
        %p457 = pneg %p115
        %p458 = pneg %p112
        %p459 = pneg %p136
        %p460 = pneg %p133
        %p461 = pneg %p157
        %p462 = pneg %p154
        %p463 = pneg %p178
        %p464 = pneg %p175
        %p465 = pneg %p199
        %p466 = pneg %p196
        %p467 = pneg %p220
        %p468 = pneg %p217
        %p469 = pneg %p241
        %p470 = pneg %p238
        %p471 = pneg %p262
        %p472 = pneg %p259
        %p473 = pneg %p283
        %p474 = pneg %p280
        %p475 = pneg %p304
        %p476 = pneg %p301
        %p477 = pneg %p325
        %p478 = pneg %p322
        %p479 = pneg %p351
        %p480 = pneg %p348
        %s481 = sand.u32 %s338, 1
        %s482 = scalar_lea.sflag [#allocation4], %s481
        %s483 = sand.u32 %s338, 1
        %s484 = smul.addr %s483, 48
        %s485 = scalar_lea.vmem [#allocation5], %s484
        %v486 = vld [vmem:[%s441] sm:$0xff]
        %v487 = vld [vmem:[%s441 + $0x8] sm:$0xff]
        %v488 = vld [vmem:[%s441 + $0x10] sm:$0xff]
        %v489 = vld [vmem:[%s441 + $0x18] sm:$0xff]
        %v490 = vld [vmem:[%s441 + $0x20] sm:$0xff]
        %v491 = vld [vmem:[%s441 + $0x28] sm:$0xff]
        %v492 = vld [vmem:[%s1] sm:$0xff]
        %v493 = vld [vmem:[%s1 + $0x8] sm:$0xff]
        %v494 = vld [vmem:[%s1 + $0x10] sm:$0xff]
        %v495 = vld [vmem:[%s1 + $0x18] sm:$0xff]
        %v496 = vld [vmem:[%s1 + $0x20] sm:$0xff]
        %v497 = vld [vmem:[%s1 + $0x28] sm:$0xff]
        %v498 = vld [vmem:[%s1 + $0x30] sm:$0xff]
        %v499 = vld [vmem:[%s1 + $0x38] sm:$0xff]
        %v500 = vld [vmem:[%s1 + $0x40] sm:$0xff]
        %v501 = vld [vmem:[%s1 + $0x48] sm:$0xff]
        %v502 = vld [vmem:[%s1 + $0x50] sm:$0xff]
        %v503 = vld [vmem:[%s1 + $0x58] sm:$0xff]
        %v504 = vld [vmem:[%s1 + $0x60] sm:$0xff]
        %v505 = vld [vmem:[%s1 + $0x68] sm:$0xff]
        %v506 = vld [vmem:[%s1 + $0x70] sm:$0xff]
        %v507 = vld [vmem:[%s1 + $0x78] sm:$0xff]
        %v508 = vld [vmem:[%s1 + $0x80] sm:$0xff]
        %v509 = vld [vmem:[%s1 + $0x88] sm:$0xff]
        %v510 = vld [vmem:[%s1 + $0x90] sm:$0xff]
        %v511 = vld [vmem:[%s1 + $0x98] sm:$0xff]
        %v512 = vld [vmem:[%s1 + $0xa0] sm:$0xff]
        %v513 = vld [vmem:[%s1 + $0xa8] sm:$0xff]
        %v514 = vld [vmem:[%s1 + $0xb0] sm:$0xff]
        %v515 = vld [vmem:[%s1 + $0xb8] sm:$0xff]
        %v516 = vld [vmem:[%s2] sm:$0x1]
        %v518 = vlaneseq
        %v519 = vshrl.u32 %v518, 7
        %v520 = vsub.s32 0, %v519
        %v521 = vrot.slane %v516, %v520
        %vm523 = vcmask 523264
        %v525 = vsel %vm523, %v487, 0
        %v528 = vsel %vm523, %v489, 0
        %v531 = vsel %vm523, %v491, 0
        %533 = vmatprep.subr.mxu0 0.0
        %534 = vmatpush1.msra.mxu0 %v492
        %535 = vmatprep.subr.mxu0 0.0
        %536 = vmatpush1.msra.mxu0 %v493
        %537 = vmatprep.subr.mxu0 0.0
        %538 = vmatpush1.msra.mxu0 %v494
        %539 = vmatprep.subr.mxu0 0.0
        %540 = vmatpush1.msra.mxu0 %v495
        %541 = vmatprep.subr.mxu0 0.0
        %542 = vmatpush1.msra.mxu0 %v496
        %543 = vmatprep.subr.mxu0 0.0
        %544 = vmatpush1.msra.mxu0 %v497
        %545 = vmatprep.subr.mxu0 0.0
        %546 = vmatpush1.msra.mxu0 %v498
        %547 = vmatprep.subr.mxu0 0.0
        %548 = vmatpush1.msra.mxu0 %v499
        %549 = vmatprep.subr.mxu0 0.0
        %550 = vmatpush1.msra.mxu0 %v500
        %551 = vmatprep.subr.mxu0 0.0
        %552 = vmatpush1.msra.mxu0 %v501
        %553 = vmatprep.subr.mxu0 0.0
        %554 = vmatpush1.msra.mxu0 %v502
        %555 = vmatprep.subr.mxu0 0.0
        %556 = vmatpush1.msra.mxu0 %v503
        %557 = vmatprep.subr.mxu0 0.0
        %558 = vmatpush1.msra.mxu0 %v504
        %559 = vmatprep.subr.mxu0 0.0
        %560 = vmatpush1.msra.mxu0 %v505
        %561 = vmatprep.subr.mxu0 0.0
        %562 = vmatpush1.msra.mxu0 %v506
        %563 = vmatprep.subr.mxu0 0.0
        %564 = vmatpush1.msra.mxu0 %v507
        %565 = vmatprep.subr.mxu0 0.0
        %566 = vmatpush1.msra.mxu0 %v508
        %567 = vmatprep.subr.mxu0 0.0
        %568 = vmatpush1.msra.mxu0 %v509
        %569 = vmatprep.subr.mxu0 0.0
        %570 = vmatpush1.msra.mxu0 %v510
        %571 = vmatprep.subr.mxu0 0.0
        %572 = vmatpush1.msra.mxu0 %v511
        %573 = vmatprep.subr.mxu0 0.0
        %574 = vmatpush1.msra.mxu0 %v512
        %575 = vmatprep.subr.mxu0 0.0
        %576 = vmatpush1.msra.mxu0 %v513
        %577 = vmatprep.subr.mxu0 0.0
        %578 = vmatpush1.msra.mxu0 %v514
        %579 = vmatprep.subr.mxu0 0.0
        %580 = vmatpush1.msra.mxu0 %v515
        %581 = vmatprep.subr.mxu0 0.0
        %582 = vmatpush1.msra.mxu0 0.0
        %583 = vmatprep.subr.mxu0 0.0
        %584 = vmatpush1.msra.mxu0 0.0
        %585 = vmatprep.subr.mxu0 0.0
        %586 = vmatpush1.msra.mxu0 0.0
        %587 = vmatprep.subr.mxu0 0.0
        %588 = vmatpush1.msra.mxu0 0.0
        %589 = vmatprep.subr.mxu0 0.0
        %590 = vmatpush1.msra.mxu0 0.0
        %591 = vmatprep.subr.mxu0 0.0
        %592 = vmatpush1.msra.mxu0 0.0
        %593 = vmatprep.subr.mxu0 0.0
        %594 = vmatpush1.msra.mxu0 0.0
        %595 = vmatprep.subr.mxu0 0.0
        %596 = vmatpush1.msra.mxu0 0.0
        %597 = vmatprep.mubr.f32.mxu0 %v525
        %598 = vmatmul.mubr.f32.gmra.mrb[0].mxu0 %v486
        %v599 = vpop.f32.mrb[0].mxu0
        %v600 = vadd.f32 %v521, %v599
        %v601 = vpop.f32.mrb[0].mxu0
        %602 = vmatprep.mubr.f32.mxu0 %v528
        %603 = vmatmul.mubr.f32.gmra.mrb[0].mxu0 %v488
        %v604 = vpop.f32.mrb[0].mxu0
        %v605 = vadd.f32 %v521, %v604
        %v606 = vpop.f32.mrb[0].mxu0
        %607 = vmatprep.mubr.f32.mxu0 %v531
        %608 = vmatmul.mubr.f32.gmra.mrb[0].mxu0 %v490
        %v609 = vpop.f32.mrb[0].mxu0
        %v610 = vadd.f32 %v521, %v609
        %v611 = vpop.f32.mrb[0].mxu0
        %612 = vdwg.mxu0
        %v613 = vld [vmem:[%s3] sm:$0xff]
        %v614 = vld [vmem:[%s3 + $0x8] sm:$0x7]
        %vm615 = vcmask 195584
        %v617 = vsel %vm615, %v613, 0
        %v620 = vsel %vm615, %v614, 0
        %622 = vmatprep.subr.mxu0 0.0
        %623 = vmatpush1.msra.mxu0 %v600
        %624 = vmatprep.subr.mxu0 0.0
        %625 = vmatpush1.msra.mxu0 %v605
        %626 = vmatprep.subr.mxu0 0.0
        %627 = vmatpush1.msra.mxu0 %v610
        %628 = vmatprep.subr.mxu0 0.0
        %629 = vmatpush1.msra.mxu0 0.0
        %630 = vmatprep.subr.mxu0 0.0
        %631 = vmatpush1.msra.mxu0 0.0
        %632 = vmatprep.subr.mxu0 0.0
        %633 = vmatpush1.msra.mxu0 0.0
        %634 = vmatprep.subr.mxu0 0.0
        %635 = vmatpush1.msra.mxu0 0.0
        %636 = vmatprep.subr.mxu0 0.0
        %637 = vmatpush1.msra.mxu0 0.0
        %638 = vmatprep.subr.mxu0 0.0
        %639 = vmatpush1.msra.mxu0 0.0
        %640 = vmatprep.subr.mxu0 0.0
        %641 = vmatpush1.msra.mxu0 0.0
        %642 = vmatprep.subr.mxu0 0.0
        %643 = vmatpush1.msra.mxu0 0.0
        %644 = vmatprep.subr.mxu0 0.0
        %645 = vmatpush1.msra.mxu0 0.0
        %646 = vmatprep.subr.mxu0 0.0
        %647 = vmatpush1.msra.mxu0 0.0
        %648 = vmatprep.subr.mxu0 0.0
        %649 = vmatpush1.msra.mxu0 0.0
        %650 = vmatprep.subr.mxu0 0.0
        %651 = vmatpush1.msra.mxu0 0.0
        %652 = vmatprep.subr.mxu0 0.0
        %653 = vmatpush1.msra.mxu0 0.0
        %654 = vmatprep.subr.mxu0 0.0
        %655 = vmatpush1.msra.mxu0 0.0
        %656 = vmatprep.subr.mxu0 0.0
        %657 = vmatpush1.msra.mxu0 0.0
        %658 = vmatprep.subr.mxu0 0.0
        %659 = vmatpush1.msra.mxu0 0.0
        %660 = vmatprep.subr.mxu0 0.0
        %661 = vmatpush1.msra.mxu0 0.0
        %662 = vmatprep.subr.mxu0 0.0
        %663 = vmatpush1.msra.mxu0 0.0
        %664 = vmatprep.subr.mxu0 0.0
        %665 = vmatpush1.msra.mxu0 0.0
        %666 = vmatprep.subr.mxu0 0.0
        %667 = vmatpush1.msra.mxu0 0.0
        %668 = vmatprep.subr.mxu0 0.0
        %669 = vmatpush1.msra.mxu0 0.0
        %670 = vmatprep.subr.mxu0 0.0
        %671 = vmatpush1.msra.mxu0 0.0
        %672 = vmatprep.subr.mxu0 0.0
        %673 = vmatpush1.msra.mxu0 0.0
        %674 = vmatprep.subr.mxu0 0.0
        %675 = vmatpush1.msra.mxu0 0.0
        %676 = vmatprep.subr.mxu0 0.0
        %677 = vmatpush1.msra.mxu0 0.0
        %678 = vmatprep.subr.mxu0 0.0
        %679 = vmatpush1.msra.mxu0 0.0
        %680 = vmatprep.subr.mxu0 0.0
        %681 = vmatpush1.msra.mxu0 0.0
        %682 = vmatprep.subr.mxu0 0.0
        %683 = vmatpush1.msra.mxu0 0.0
        %684 = vmatprep.subr.mxu0 0.0
        %685 = vmatpush1.msra.mxu0 0.0
        %686 = vmatprep.mubr.f32.mxu0 0.0
        %687 = vmatmul.mubr.f32.gmra.mrb[0].mxu0 %v617
        %v688 = vpop.f32.mrb[0].mxu0
        %v689 = vadd.f32 0.0, %v688
        %v690 = vpop.f32.mrb[0].mxu0
        %691 = vmatprep.mubr.f32.mxu0 0.0
        %692 = vmatmul.mubr.f32.gmra.mrb[0].mxu0 %v620
        %v693 = vpop.f32.mrb[0].mxu0
        %v694 = vadd.f32 0.0, %v693
        %v695 = vpop.f32.mrb[0].mxu0
        %696 = vdwg.mxu0
        %v697 = vld [vmem:[%s4] sm:$0xff]
        %v698 = vld [vmem:[%s4 + $0x8] sm:$0xff]
        %v699 = vld [vmem:[%s4 + $0x10] sm:$0xff]
        %v700 = vld [vmem:[%s4 + $0x18] sm:$0xff]
        %v701 = vld [vmem:[%s4 + $0x20] sm:$0xff]
        %v702 = vld [vmem:[%s4 + $0x28] sm:$0xff]
        %v703 = vld [vmem:[%s4 + $0x30] sm:$0xff]
        %v704 = vld [vmem:[%s4 + $0x38] sm:$0xff]
        %v705 = vld [vmem:[%s4 + $0x40] sm:$0xff]
        %v706 = vld [vmem:[%s4 + $0x48] sm:$0xff]
        %v707 = vld [vmem:[%s4 + $0x50] sm:$0xff]
        %v708 = vld [vmem:[%s4 + $0x58] sm:$0xff]
        %s709 = scalar_lea.vmem %s3, 16
        %v710 = vld [vmem:[%s709] sm:$0xff]
        %v711 = vld [vmem:[%s709 + $0x8] sm:$0x7]
        %v713 = vsel %vm615, %v710, 0
        %v716 = vsel %vm615, %v711, 0
        %718 = vmatprep.subr.mxu0 0.0
        %719 = vmatpush1.msra.mxu0 %v600
        %720 = vmatprep.subr.mxu0 0.0
        %721 = vmatpush1.msra.mxu0 %v605
        %722 = vmatprep.subr.mxu0 0.0
        %723 = vmatpush1.msra.mxu0 %v610
        %724 = vmatprep.subr.mxu0 0.0
        %725 = vmatpush1.msra.mxu0 0.0
        %726 = vmatprep.subr.mxu0 0.0
        %727 = vmatpush1.msra.mxu0 0.0
        %728 = vmatprep.subr.mxu0 0.0
        %729 = vmatpush1.msra.mxu0 0.0
        %730 = vmatprep.subr.mxu0 0.0
        %731 = vmatpush1.msra.mxu0 0.0
        %732 = vmatprep.subr.mxu0 0.0
        %733 = vmatpush1.msra.mxu0 0.0
        %734 = vmatprep.subr.mxu0 0.0
        %735 = vmatpush1.msra.mxu0 0.0
        %736 = vmatprep.subr.mxu0 0.0
        %737 = vmatpush1.msra.mxu0 0.0
        %738 = vmatprep.subr.mxu0 0.0
        %739 = vmatpush1.msra.mxu0 0.0
        %740 = vmatprep.subr.mxu0 0.0
        %741 = vmatpush1.msra.mxu0 0.0
        %742 = vmatprep.subr.mxu0 0.0
        %743 = vmatpush1.msra.mxu0 0.0
        %744 = vmatprep.subr.mxu0 0.0
        %745 = vmatpush1.msra.mxu0 0.0
        %746 = vmatprep.subr.mxu0 0.0
        %747 = vmatpush1.msra.mxu0 0.0
        %748 = vmatprep.subr.mxu0 0.0
        %749 = vmatpush1.msra.mxu0 0.0
        %750 = vmatprep.subr.mxu0 0.0
        %751 = vmatpush1.msra.mxu0 0.0
        %752 = vmatprep.subr.mxu0 0.0
        %753 = vmatpush1.msra.mxu0 0.0
        %754 = vmatprep.subr.mxu0 0.0
        %755 = vmatpush1.msra.mxu0 0.0
        %756 = vmatprep.subr.mxu0 0.0
        %757 = vmatpush1.msra.mxu0 0.0
        %758 = vmatprep.subr.mxu0 0.0
        %759 = vmatpush1.msra.mxu0 0.0
        %760 = vmatprep.subr.mxu0 0.0
        %761 = vmatpush1.msra.mxu0 0.0
        %762 = vmatprep.subr.mxu0 0.0
        %763 = vmatpush1.msra.mxu0 0.0
        %764 = vmatprep.subr.mxu0 0.0
        %765 = vmatpush1.msra.mxu0 0.0
        %766 = vmatprep.subr.mxu0 0.0
        %767 = vmatpush1.msra.mxu0 0.0
        %768 = vmatprep.subr.mxu0 0.0
        %769 = vmatpush1.msra.mxu0 0.0
        %770 = vmatprep.subr.mxu0 0.0
        %771 = vmatpush1.msra.mxu0 0.0
        %772 = vmatprep.subr.mxu0 0.0
        %773 = vmatpush1.msra.mxu0 0.0
        %774 = vmatprep.subr.mxu0 0.0
        %775 = vmatpush1.msra.mxu0 0.0
        %776 = vmatprep.subr.mxu0 0.0
        %777 = vmatpush1.msra.mxu0 0.0
        %778 = vmatprep.subr.mxu0 0.0
        %779 = vmatpush1.msra.mxu0 0.0
        %780 = vmatprep.subr.mxu0 0.0
        %781 = vmatpush1.msra.mxu0 0.0
        %782 = vmatprep.mubr.f32.mxu0 0.0
        %783 = vmatmul.mubr.f32.gmra.mrb[0].mxu0 %v713
        %v784 = vpop.f32.mrb[0].mxu0
        %v785 = vadd.f32 0.0, %v784
        %v786 = vpop.f32.mrb[0].mxu0
        %787 = vmatprep.mubr.f32.mxu0 0.0
        %788 = vmatmul.mubr.f32.gmra.mrb[0].mxu0 %v716
        %v789 = vpop.f32.mrb[0].mxu0
        %v790 = vadd.f32 0.0, %v789
        %v791 = vpop.f32.mrb[0].mxu0
        %792 = vdwg.mxu0
        %s793 = scalar_lea.vmem %s4, 96
        %v794 = vld [vmem:[%s793] sm:$0xff]
        %v795 = vld [vmem:[%s793 + $0x8] sm:$0xff]
        %v796 = vld [vmem:[%s793 + $0x10] sm:$0xff]
        %v797 = vld [vmem:[%s793 + $0x18] sm:$0xff]
        %v798 = vld [vmem:[%s793 + $0x20] sm:$0xff]
        %v799 = vld [vmem:[%s793 + $0x28] sm:$0xff]
        %v800 = vld [vmem:[%s793 + $0x30] sm:$0xff]
        %v801 = vld [vmem:[%s793 + $0x38] sm:$0xff]
        %v802 = vld [vmem:[%s793 + $0x40] sm:$0xff]
        %v803 = vld [vmem:[%s793 + $0x48] sm:$0xff]
        %v804 = vld [vmem:[%s793 + $0x50] sm:$0xff]
        %v805 = vld [vmem:[%s793 + $0x58] sm:$0xff]
        %vm806 = vcmask 785408
        %v808 = vsel %vm806, %v785, 0
        %v811 = vsel %vm806, %v790, 0
        %813 = vmatprep.subr.mxu0 0.0
        %814 = vmatpush1.msra.mxu0 %v794
        %815 = vmatprep.subr.mxu0 0.0
        %816 = vmatpush1.msra.mxu0 %v795
        %817 = vmatprep.subr.mxu0 0.0
        %818 = vmatpush1.msra.mxu0 %v796
        %819 = vmatprep.subr.mxu0 0.0
        %820 = vmatpush1.msra.mxu0 %v797
        %821 = vmatprep.subr.mxu0 0.0
        %822 = vmatpush1.msra.mxu0 %v798
        %823 = vmatprep.subr.mxu0 0.0
        %824 = vmatpush1.msra.mxu0 %v799
        %825 = vmatprep.subr.mxu0 0.0
        %826 = vmatpush1.msra.mxu0 %v800
        %827 = vmatprep.subr.mxu0 0.0
        %828 = vmatpush1.msra.mxu0 %v801
        %829 = vmatprep.subr.mxu0 0.0
        %830 = vmatpush1.msra.mxu0 %v802
        %831 = vmatprep.subr.mxu0 0.0
        %832 = vmatpush1.msra.mxu0 %v803
        %833 = vmatprep.subr.mxu0 0.0
        %834 = vmatpush1.msra.mxu0 %v804
        %835 = vmatprep.subr.mxu0 0.0
        %836 = vmatpush1.msra.mxu0 %v805
        %837 = vmatprep.subr.mxu0 0.0
        %838 = vmatpush1.msra.mxu0 0.0
        %839 = vmatprep.subr.mxu0 0.0
        %840 = vmatpush1.msra.mxu0 0.0
        %841 = vmatprep.subr.mxu0 0.0
        %842 = vmatpush1.msra.mxu0 0.0
        %843 = vmatprep.subr.mxu0 0.0
        %844 = vmatpush1.msra.mxu0 0.0
        %845 = vmatprep.subr.mxu0 0.0
        %846 = vmatpush1.msra.mxu0 0.0
        %847 = vmatprep.subr.mxu0 0.0
        %848 = vmatpush1.msra.mxu0 0.0
        %849 = vmatprep.subr.mxu0 0.0
        %850 = vmatpush1.msra.mxu0 0.0
        %851 = vmatprep.subr.mxu0 0.0
        %852 = vmatpush1.msra.mxu0 0.0
        %853 = vmatprep.subr.mxu0 0.0
        %854 = vmatpush1.msra.mxu0 0.0
        %855 = vmatprep.subr.mxu0 0.0
        %856 = vmatpush1.msra.mxu0 0.0
        %857 = vmatprep.subr.mxu0 0.0
        %858 = vmatpush1.msra.mxu0 0.0
        %859 = vmatprep.subr.mxu0 0.0
        %860 = vmatpush1.msra.mxu0 0.0
        %861 = vmatprep.subr.mxu0 0.0
        %862 = vmatpush1.msra.mxu0 0.0
        %863 = vmatprep.subr.mxu0 0.0
        %864 = vmatpush1.msra.mxu0 0.0
        %865 = vmatprep.subr.mxu0 0.0
        %866 = vmatpush1.msra.mxu0 0.0
        %867 = vmatprep.subr.mxu0 0.0
        %868 = vmatpush1.msra.mxu0 0.0
        %869 = vmatprep.subr.mxu0 0.0
        %870 = vmatpush1.msra.mxu0 0.0
        %871 = vmatprep.subr.mxu0 0.0
        %872 = vmatpush1.msra.mxu0 0.0
        %873 = vmatprep.subr.mxu0 0.0
        %874 = vmatpush1.msra.mxu0 0.0
        %875 = vmatprep.subr.mxu0 0.0
        %876 = vmatpush1.msra.mxu0 0.0
        %877 = vmatprep.mubr.f32.mxu0 0.0
        %878 = vmatmul.mubr.f32.gmra.mrb[0].mxu0 %v808
        %v879 = vpop.f32.mrb[0].mxu0
        %v880 = vadd.f32 0.0, %v879
        %v881 = vpop.f32.mrb[0].mxu0
        %882 = vmatprep.mubr.f32.mxu0 0.0
        %883 = vmatmul.mubr.f32.gmra.mrb[0].mxu0 %v811
        %v884 = vpop.f32.mrb[0].mxu0
        %v885 = vadd.f32 0.0, %v884
        %v886 = vpop.f32.mrb[0].mxu0
        %887 = vdwg.mxu0
        %v889 = vsel %vm806, %v689, 0
        %v892 = vsel %vm806, %v694, 0
        %894 = vmatprep.subr.mxu0 0.0
        %895 = vmatpush1.msra.mxu0 %v697
        %896 = vmatprep.subr.mxu0 0.0
        %897 = vmatpush1.msra.mxu0 %v698
        %898 = vmatprep.subr.mxu0 0.0
        %899 = vmatpush1.msra.mxu0 %v699
        %900 = vmatprep.subr.mxu0 0.0
        %901 = vmatpush1.msra.mxu0 %v700
        %902 = vmatprep.subr.mxu0 0.0
        %903 = vmatpush1.msra.mxu0 %v701
        %904 = vmatprep.subr.mxu0 0.0
        %905 = vmatpush1.msra.mxu0 %v702
        %906 = vmatprep.subr.mxu0 0.0
        %907 = vmatpush1.msra.mxu0 %v703
        %908 = vmatprep.subr.mxu0 0.0
        %909 = vmatpush1.msra.mxu0 %v704
        %910 = vmatprep.subr.mxu0 0.0
        %911 = vmatpush1.msra.mxu0 %v705
        %912 = vmatprep.subr.mxu0 0.0
        %913 = vmatpush1.msra.mxu0 %v706
        %914 = vmatprep.subr.mxu0 0.0
        %915 = vmatpush1.msra.mxu0 %v707
        %916 = vmatprep.subr.mxu0 0.0
        %917 = vmatpush1.msra.mxu0 %v708
        %918 = vmatprep.subr.mxu0 0.0
        %919 = vmatpush1.msra.mxu0 0.0
        %920 = vmatprep.subr.mxu0 0.0
        %921 = vmatpush1.msra.mxu0 0.0
        %922 = vmatprep.subr.mxu0 0.0
        %923 = vmatpush1.msra.mxu0 0.0
        %924 = vmatprep.subr.mxu0 0.0
        %925 = vmatpush1.msra.mxu0 0.0
        %926 = vmatprep.subr.mxu0 0.0
        %927 = vmatpush1.msra.mxu0 0.0
        %928 = vmatprep.subr.mxu0 0.0
        %929 = vmatpush1.msra.mxu0 0.0
        %930 = vmatprep.subr.mxu0 0.0
        %931 = vmatpush1.msra.mxu0 0.0
        %932 = vmatprep.subr.mxu0 0.0
        %933 = vmatpush1.msra.mxu0 0.0
        %934 = vmatprep.subr.mxu0 0.0
        %935 = vmatpush1.msra.mxu0 0.0
        %936 = vmatprep.subr.mxu0 0.0
        %937 = vmatpush1.msra.mxu0 0.0
        %938 = vmatprep.subr.mxu0 0.0
        %939 = vmatpush1.msra.mxu0 0.0
        %940 = vmatprep.subr.mxu0 0.0
        %941 = vmatpush1.msra.mxu0 0.0
        %942 = vmatprep.subr.mxu0 0.0
        %943 = vmatpush1.msra.mxu0 0.0
        %944 = vmatprep.subr.mxu0 0.0
        %945 = vmatpush1.msra.mxu0 0.0
        %946 = vmatprep.subr.mxu0 0.0
        %947 = vmatpush1.msra.mxu0 0.0
        %948 = vmatprep.subr.mxu0 0.0
        %949 = vmatpush1.msra.mxu0 0.0
        %950 = vmatprep.subr.mxu0 0.0
        %951 = vmatpush1.msra.mxu0 0.0
        %952 = vmatprep.subr.mxu0 0.0
        %953 = vmatpush1.msra.mxu0 0.0
        %954 = vmatprep.subr.mxu0 0.0
        %955 = vmatpush1.msra.mxu0 0.0
        %956 = vmatprep.subr.mxu0 0.0
        %957 = vmatpush1.msra.mxu0 0.0
        %958 = vmatprep.mubr.f32.mxu0 0.0
        %959 = vmatmul.mubr.f32.gmra.mrb[0].mxu0 %v889
        %v960 = vpop.f32.mrb[0].mxu0
        %v961 = vadd.f32 %v880, %v960
        %v962 = vpop.f32.mrb[0].mxu0
        %963 = vmatprep.mubr.f32.mxu0 0.0
        %964 = vmatmul.mubr.f32.gmra.mrb[0].mxu0 %v892
        %v965 = vpop.f32.mrb[0].mxu0
        %v966 = vadd.f32 %v885, %v965
        %v967 = vpop.f32.mrb[0].mxu0
        %968 = vdwg.mxu0
        %s969 = scalar_lea.vmem %s3, 32
        %v970 = vld [vmem:[%s969] sm:$0xff]
        %v971 = vld [vmem:[%s969 + $0x8] sm:$0x7]
        %v973 = vsel %vm615, %v970, 0
        %v976 = vsel %vm615, %v971, 0
        %978 = vmatprep.subr.mxu0 0.0
        %979 = vmatpush1.msra.mxu0 %v600
        %980 = vmatprep.subr.mxu0 0.0
        %981 = vmatpush1.msra.mxu0 %v605
        %982 = vmatprep.subr.mxu0 0.0
        %983 = vmatpush1.msra.mxu0 %v610
        %984 = vmatprep.subr.mxu0 0.0
        %985 = vmatpush1.msra.mxu0 0.0
        %986 = vmatprep.subr.mxu0 0.0
        %987 = vmatpush1.msra.mxu0 0.0
        %988 = vmatprep.subr.mxu0 0.0
        %989 = vmatpush1.msra.mxu0 0.0
        %990 = vmatprep.subr.mxu0 0.0
        %991 = vmatpush1.msra.mxu0 0.0
        %992 = vmatprep.subr.mxu0 0.0
        %993 = vmatpush1.msra.mxu0 0.0
        %994 = vmatprep.subr.mxu0 0.0
        %995 = vmatpush1.msra.mxu0 0.0
        %996 = vmatprep.subr.mxu0 0.0
        %997 = vmatpush1.msra.mxu0 0.0
        %998 = vmatprep.subr.mxu0 0.0
        %999 = vmatpush1.msra.mxu0 0.0
        %1000 = vmatprep.subr.mxu0 0.0
        %1001 = vmatpush1.msra.mxu0 0.0
        %1002 = vmatprep.subr.mxu0 0.0
        %1003 = vmatpush1.msra.mxu0 0.0
        %1004 = vmatprep.subr.mxu0 0.0
        %1005 = vmatpush1.msra.mxu0 0.0
        %1006 = vmatprep.subr.mxu0 0.0
        %1007 = vmatpush1.msra.mxu0 0.0
        %1008 = vmatprep.subr.mxu0 0.0
        %1009 = vmatpush1.msra.mxu0 0.0
        %1010 = vmatprep.subr.mxu0 0.0
        %1011 = vmatpush1.msra.mxu0 0.0
        %1012 = vmatprep.subr.mxu0 0.0
        %1013 = vmatpush1.msra.mxu0 0.0
        %1014 = vmatprep.subr.mxu0 0.0
        %1015 = vmatpush1.msra.mxu0 0.0
        %1016 = vmatprep.subr.mxu0 0.0
        %1017 = vmatpush1.msra.mxu0 0.0
        %1018 = vmatprep.subr.mxu0 0.0
        %1019 = vmatpush1.msra.mxu0 0.0
        %1020 = vmatprep.subr.mxu0 0.0
        %1021 = vmatpush1.msra.mxu0 0.0
        %1022 = vmatprep.subr.mxu0 0.0
        %1023 = vmatpush1.msra.mxu0 0.0
        %1024 = vmatprep.subr.mxu0 0.0
        %1025 = vmatpush1.msra.mxu0 0.0
        %1026 = vmatprep.subr.mxu0 0.0
        %1027 = vmatpush1.msra.mxu0 0.0
        %1028 = vmatprep.subr.mxu0 0.0
        %1029 = vmatpush1.msra.mxu0 0.0
        %1030 = vmatprep.subr.mxu0 0.0
        %1031 = vmatpush1.msra.mxu0 0.0
        %1032 = vmatprep.subr.mxu0 0.0
        %1033 = vmatpush1.msra.mxu0 0.0
        %1034 = vmatprep.subr.mxu0 0.0
        %1035 = vmatpush1.msra.mxu0 0.0
        %1036 = vmatprep.subr.mxu0 0.0
        %1037 = vmatpush1.msra.mxu0 0.0
        %1038 = vmatprep.subr.mxu0 0.0
        %1039 = vmatpush1.msra.mxu0 0.0
        %1040 = vmatprep.subr.mxu0 0.0
        %1041 = vmatpush1.msra.mxu0 0.0
        %1042 = vmatprep.mubr.f32.mxu0 0.0
        %1043 = vmatmul.mubr.f32.gmra.mrb[0].mxu0 %v973
        %v1044 = vpop.f32.mrb[0].mxu0
        %v1045 = vadd.f32 0.0, %v1044
        %v1046 = vpop.f32.mrb[0].mxu0
        %1047 = vmatprep.mubr.f32.mxu0 0.0
        %1048 = vmatmul.mubr.f32.gmra.mrb[0].mxu0 %v976
        %v1049 = vpop.f32.mrb[0].mxu0
        %v1050 = vadd.f32 0.0, %v1049
        %v1051 = vpop.f32.mrb[0].mxu0
        %1052 = vdwg.mxu0
        %s1053 = scalar_lea.vmem %s4, 192
        %v1054 = vld [vmem:[%s1053] sm:$0xff]
        %v1055 = vld [vmem:[%s1053 + $0x8] sm:$0xff]
        %v1056 = vld [vmem:[%s1053 + $0x10] sm:$0xff]
        %v1057 = vld [vmem:[%s1053 + $0x18] sm:$0xff]
        %v1058 = vld [vmem:[%s1053 + $0x20] sm:$0xff]
        %v1059 = vld [vmem:[%s1053 + $0x28] sm:$0xff]
        %v1060 = vld [vmem:[%s1053 + $0x30] sm:$0xff]
        %v1061 = vld [vmem:[%s1053 + $0x38] sm:$0xff]
        %v1062 = vld [vmem:[%s1053 + $0x40] sm:$0xff]
        %v1063 = vld [vmem:[%s1053 + $0x48] sm:$0xff]
        %v1064 = vld [vmem:[%s1053 + $0x50] sm:$0xff]
        %v1065 = vld [vmem:[%s1053 + $0x58] sm:$0xff]
        %v1067 = vsel %vm806, %v1045, 0
        %v1070 = vsel %vm806, %v1050, 0
        %1072 = vmatprep.subr.mxu0 0.0
        %1073 = vmatpush1.msra.mxu0 %v1054
        %1074 = vmatprep.subr.mxu0 0.0
        %1075 = vmatpush1.msra.mxu0 %v1055
        %1076 = vmatprep.subr.mxu0 0.0
        %1077 = vmatpush1.msra.mxu0 %v1056
        %1078 = vmatprep.subr.mxu0 0.0
        %1079 = vmatpush1.msra.mxu0 %v1057
        %1080 = vmatprep.subr.mxu0 0.0
        %1081 = vmatpush1.msra.mxu0 %v1058
        %1082 = vmatprep.subr.mxu0 0.0
        %1083 = vmatpush1.msra.mxu0 %v1059
        %1084 = vmatprep.subr.mxu0 0.0
        %1085 = vmatpush1.msra.mxu0 %v1060
        %1086 = vmatprep.subr.mxu0 0.0
        %1087 = vmatpush1.msra.mxu0 %v1061
        %1088 = vmatprep.subr.mxu0 0.0
        %1089 = vmatpush1.msra.mxu0 %v1062
        %1090 = vmatprep.subr.mxu0 0.0
        %1091 = vmatpush1.msra.mxu0 %v1063
        %1092 = vmatprep.subr.mxu0 0.0
        %1093 = vmatpush1.msra.mxu0 %v1064
        %1094 = vmatprep.subr.mxu0 0.0
        %1095 = vmatpush1.msra.mxu0 %v1065
        %1096 = vmatprep.subr.mxu0 0.0
        %1097 = vmatpush1.msra.mxu0 0.0
        %1098 = vmatprep.subr.mxu0 0.0
        %1099 = vmatpush1.msra.mxu0 0.0
        %1100 = vmatprep.subr.mxu0 0.0
        %1101 = vmatpush1.msra.mxu0 0.0
        %1102 = vmatprep.subr.mxu0 0.0
        %1103 = vmatpush1.msra.mxu0 0.0
        %1104 = vmatprep.subr.mxu0 0.0
        %1105 = vmatpush1.msra.mxu0 0.0
        %1106 = vmatprep.subr.mxu0 0.0
        %1107 = vmatpush1.msra.mxu0 0.0
        %1108 = vmatprep.subr.mxu0 0.0
        %1109 = vmatpush1.msra.mxu0 0.0
        %1110 = vmatprep.subr.mxu0 0.0
        %1111 = vmatpush1.msra.mxu0 0.0
        %1112 = vmatprep.subr.mxu0 0.0
        %1113 = vmatpush1.msra.mxu0 0.0
        %1114 = vmatprep.subr.mxu0 0.0
        %1115 = vmatpush1.msra.mxu0 0.0
        %1116 = vmatprep.subr.mxu0 0.0
        %1117 = vmatpush1.msra.mxu0 0.0
        %1118 = vmatprep.subr.mxu0 0.0
        %1119 = vmatpush1.msra.mxu0 0.0
        %1120 = vmatprep.subr.mxu0 0.0
        %1121 = vmatpush1.msra.mxu0 0.0
        %1122 = vmatprep.subr.mxu0 0.0
        %1123 = vmatpush1.msra.mxu0 0.0
        %1124 = vmatprep.subr.mxu0 0.0
        %1125 = vmatpush1.msra.mxu0 0.0
        %1126 = vmatprep.subr.mxu0 0.0
        %1127 = vmatpush1.msra.mxu0 0.0
        %1128 = vmatprep.subr.mxu0 0.0
        %1129 = vmatpush1.msra.mxu0 0.0
        %1130 = vmatprep.subr.mxu0 0.0
        %1131 = vmatpush1.msra.mxu0 0.0
        %1132 = vmatprep.subr.mxu0 0.0
        %1133 = vmatpush1.msra.mxu0 0.0
        %1134 = vmatprep.subr.mxu0 0.0
        %1135 = vmatpush1.msra.mxu0 0.0
        %1136 = vmatprep.mubr.f32.mxu0 0.0
        %1137 = vmatmul.mubr.f32.gmra.mrb[0].mxu0 %v1067
        %v1138 = vpop.f32.mrb[0].mxu0
        %v1139 = vadd.f32 0.0, %v1138
        %v1140 = vpop.f32.mrb[0].mxu0
        %1141 = vmatprep.mubr.f32.mxu0 0.0
        %1142 = vmatmul.mubr.f32.gmra.mrb[0].mxu0 %v1070
        %v1143 = vpop.f32.mrb[0].mxu0
        %v1144 = vadd.f32 0.0, %v1143
        %v1145 = vpop.f32.mrb[0].mxu0
        %1146 = vdwg.mxu0
        %v1147 = vadd.f32 %v961, %v1139
        %v1148 = vadd.f32 %v966, %v1144
        %v1149 = vld [vmem:[%s5] sm:$0x1]
        %v1151 = vlaneseq
        %v1152 = vshrl.u32 %v1151, 7
        %v1153 = vsub.s32 0, %v1152
        %v1154 = vrot.slane %v1149, %v1153
        %v1156 = vadd.f32 %v1147, %v1154
        %v1157 = vadd.f32 %v1148, %v1154
        %1160 = vrot.lane.b32.xlu0 %v1156, 127
        %v1161 = vpop.permute.xlu0 %1160
        %1162 = vrot.lane.b32.xlu0 %v1157, 127
        %v1163 = vpop.permute.xlu0 %1162
        %v1166 = vmax.f32 %v1156, %v1161
        %v1167 = vmax.f32 %v1157, %v1163
        %1168 = vrot.lane.b32.xlu0 %v1156, 126
        %v1169 = vpop.permute.xlu0 %1168
        %1170 = vrot.lane.b32.xlu0 %v1157, 126
        %v1171 = vpop.permute.xlu0 %1170
        %v1174 = vmax.f32 %v1166, %v1169
        %v1175 = vmax.f32 %v1167, %v1171
        %1176 = vrot.lane.b32.xlu0 %v1156, 125
        %v1177 = vpop.permute.xlu0 %1176
        %1178 = vrot.lane.b32.xlu0 %v1157, 125
        %v1179 = vpop.permute.xlu0 %1178
        %v1182 = vmax.f32 %v1174, %v1177
        %v1183 = vmax.f32 %v1175, %v1179
        %1184 = vrot.lane.b32.xlu0 %v1156, 124
        %v1185 = vpop.permute.xlu0 %1184
        %1186 = vrot.lane.b32.xlu0 %v1157, 124
        %v1187 = vpop.permute.xlu0 %1186
        %v1190 = vmax.f32 %v1182, %v1185
        %v1191 = vmax.f32 %v1183, %v1187
        %1192 = vrot.lane.b32.xlu0 %v1156, 123
        %v1193 = vpop.permute.xlu0 %1192
        %1194 = vrot.lane.b32.xlu0 %v1157, 123
        %v1195 = vpop.permute.xlu0 %1194
        %v1198 = vmax.f32 %v1190, %v1193
        %v1199 = vmax.f32 %v1191, %v1195
        %1200 = vrot.lane.b32.xlu0 %v1156, 122
        %v1201 = vpop.permute.xlu0 %1200
        %1202 = vrot.lane.b32.xlu0 %v1157, 122
        %v1203 = vpop.permute.xlu0 %1202
        %v1206 = vmax.f32 %v1198, %v1201
        %v1207 = vmax.f32 %v1199, %v1203
        %v1208 = vld [vmem:[%s6] sm:$0xff]
        %v1209 = vld [vmem:[%s6 + $0x8] sm:$0xff]
        %v1210 = vld [vmem:[%s6 + $0x10] sm:$0xff]
        %v1211 = vld [vmem:[%s6 + $0x18] sm:$0xff]
        %v1212 = vld [vmem:[%s6 + $0x20] sm:$0x3f]
        %vm1213 = vcmask 310272
        %v1215 = vsel %vm1213, %v1206, 0
        %v1218 = vsel %vm1213, %v1207, 0
        %vm1220 = vcmask 1045504
        %v1222 = vsel %vm1220, %v1212, 0
        %1224 = vmatprep.subr.mxu0 0.0
        %1225 = vmatpush1.msra.mxu0 %v1208
        %1226 = vmatprep.subr.mxu0 0.0
        %1227 = vmatpush1.msra.mxu0 %v1209
        %1228 = vmatprep.subr.mxu0 0.0
        %1229 = vmatpush1.msra.mxu0 %v1210
        %1230 = vmatprep.subr.mxu0 0.0
        %1231 = vmatpush1.msra.mxu0 %v1211
        %1232 = vmatprep.subr.mxu0 0.0
        %1233 = vmatpush1.msra.mxu0 %v1222
        %1234 = vmatprep.subr.mxu0 0.0
        %1235 = vmatpush1.msra.mxu0 0.0
        %1236 = vmatprep.subr.mxu0 0.0
        %1237 = vmatpush1.msra.mxu0 0.0
        %1238 = vmatprep.subr.mxu0 0.0
        %1239 = vmatpush1.msra.mxu0 0.0
        %1240 = vmatprep.subr.mxu0 0.0
        %1241 = vmatpush1.msra.mxu0 0.0
        %1242 = vmatprep.subr.mxu0 0.0
        %1243 = vmatpush1.msra.mxu0 0.0
        %1244 = vmatprep.subr.mxu0 0.0
        %1245 = vmatpush1.msra.mxu0 0.0
        %1246 = vmatprep.subr.mxu0 0.0
        %1247 = vmatpush1.msra.mxu0 0.0
        %1248 = vmatprep.subr.mxu0 0.0
        %1249 = vmatpush1.msra.mxu0 0.0
        %1250 = vmatprep.subr.mxu0 0.0
        %1251 = vmatpush1.msra.mxu0 0.0
        %1252 = vmatprep.subr.mxu0 0.0
        %1253 = vmatpush1.msra.mxu0 0.0
        %1254 = vmatprep.subr.mxu0 0.0
        %1255 = vmatpush1.msra.mxu0 0.0
        %1256 = vmatprep.subr.mxu0 0.0
        %1257 = vmatpush1.msra.mxu0 0.0
        %1258 = vmatprep.subr.mxu0 0.0
        %1259 = vmatpush1.msra.mxu0 0.0
        %1260 = vmatprep.subr.mxu0 0.0
        %1261 = vmatpush1.msra.mxu0 0.0
        %1262 = vmatprep.subr.mxu0 0.0
        %1263 = vmatpush1.msra.mxu0 0.0
        %1264 = vmatprep.subr.mxu0 0.0
        %1265 = vmatpush1.msra.mxu0 0.0
        %1266 = vmatprep.subr.mxu0 0.0
        %1267 = vmatpush1.msra.mxu0 0.0
        %1268 = vmatprep.subr.mxu0 0.0
        %1269 = vmatpush1.msra.mxu0 0.0
        %1270 = vmatprep.subr.mxu0 0.0
        %1271 = vmatpush1.msra.mxu0 0.0
        %1272 = vmatprep.subr.mxu0 0.0
        %1273 = vmatpush1.msra.mxu0 0.0
        %1274 = vmatprep.subr.mxu0 0.0
        %1275 = vmatpush1.msra.mxu0 0.0
        %1276 = vmatprep.subr.mxu0 0.0
        %1277 = vmatpush1.msra.mxu0 0.0
        %1278 = vmatprep.subr.mxu0 0.0
        %1279 = vmatpush1.msra.mxu0 0.0
        %1280 = vmatprep.subr.mxu0 0.0
        %1281 = vmatpush1.msra.mxu0 0.0
        %1282 = vmatprep.subr.mxu0 0.0
        %1283 = vmatpush1.msra.mxu0 0.0
        %1284 = vmatprep.subr.mxu0 0.0
        %1285 = vmatpush1.msra.mxu0 0.0
        %1286 = vmatprep.subr.mxu0 0.0
        %1287 = vmatpush1.msra.mxu0 0.0
        %1288 = vmatprep.mubr.f32.mxu0 0.0
        %1289 = vmatmul.mubr.f32.gmra.mrb[0].mxu0 %v1215
        %v1290 = vpop.f32.mrb[0].mxu0
        %v1291 = vadd.f32 0.0, %v1290
        %v1292 = vpop.f32.mrb[0].mxu0
        %1293 = vmatprep.mubr.f32.mxu0 0.0
        %1294 = vmatmul.mubr.f32.gmra.mrb[0].mxu0 %v1218
        %v1295 = vpop.f32.mrb[0].mxu0
        %v1296 = vadd.f32 0.0, %v1295
        %v1297 = vpop.f32.mrb[0].mxu0
        %1298 = vdwg.mxu0
        %v1300 = vrot.slane %v1291, 1
        %v1302 = vmax.f32 %v1291, %v1300
        %v1303 = vrot.slane %v1291, 2
        %v1305 = vmax.f32 %v1302, %v1303
        %v1306 = vrot.slane %v1291, 3
        %v1308 = vmax.f32 %v1305, %v1306
        %vm1310 = vcmask 1043456
        %v1311 = vrot.slane %v1291, 4
        %v1312 = vrot.slane %v1296, 4
        %v1313 = vsel %vm1310, %v1311, %v1312
        %v1315 = vmax.f32 %v1308, %v1313
        %vm1316 = vcmask 1042432
        %v1317 = vrot.slane %v1291, 5
        %v1318 = vrot.slane %v1296, 5
        %v1319 = vsel %vm1316, %v1317, %v1318
        %v1321 = vmax.f32 %v1315, %v1319
        %vm1322 = vcmask 1041408
        %v1323 = vrot.slane %v1291, 6
        %v1324 = vrot.slane %v1296, 6
        %v1325 = vsel %vm1322, %v1323, %v1324
        %v1327 = vmax.f32 %v1321, %v1325
        %v1328 = vld [vmem:[%s7] sm:$0x3]
        %vm1329 = vcmask 39936
        %v1331 = vsel %vm1329, %v1328, 0
        %vm1333 = vcmask 1044480
        %v1335 = vsel %vm1333, %v1327, 0
        %1337 = vmatprep.subr.mxu0 0.0
        %1338 = vmatpush1.msra.mxu0 %v1335
        %1339 = vmatprep.subr.mxu0 0.0
        %1340 = vmatpush1.msra.mxu0 0.0
        %1341 = vmatprep.subr.mxu0 0.0
        %1342 = vmatpush1.msra.mxu0 0.0
        %1343 = vmatprep.subr.mxu0 0.0
        %1344 = vmatpush1.msra.mxu0 0.0
        %1345 = vmatprep.subr.mxu0 0.0
        %1346 = vmatpush1.msra.mxu0 0.0
        %1347 = vmatprep.subr.mxu0 0.0
        %1348 = vmatpush1.msra.mxu0 0.0
        %1349 = vmatprep.subr.mxu0 0.0
        %1350 = vmatpush1.msra.mxu0 0.0
        %1351 = vmatprep.subr.mxu0 0.0
        %1352 = vmatpush1.msra.mxu0 0.0
        %1353 = vmatprep.subr.mxu0 0.0
        %1354 = vmatpush1.msra.mxu0 0.0
        %1355 = vmatprep.subr.mxu0 0.0
        %1356 = vmatpush1.msra.mxu0 0.0
        %1357 = vmatprep.subr.mxu0 0.0
        %1358 = vmatpush1.msra.mxu0 0.0
        %1359 = vmatprep.subr.mxu0 0.0
        %1360 = vmatpush1.msra.mxu0 0.0
        %1361 = vmatprep.subr.mxu0 0.0
        %1362 = vmatpush1.msra.mxu0 0.0
        %1363 = vmatprep.subr.mxu0 0.0
        %1364 = vmatpush1.msra.mxu0 0.0
        %1365 = vmatprep.subr.mxu0 0.0
        %1366 = vmatpush1.msra.mxu0 0.0
        %1367 = vmatprep.subr.mxu0 0.0
        %1368 = vmatpush1.msra.mxu0 0.0
        %1369 = vmatprep.subr.mxu0 0.0
        %1370 = vmatpush1.msra.mxu0 0.0
        %1371 = vmatprep.subr.mxu0 0.0
        %1372 = vmatpush1.msra.mxu0 0.0
        %1373 = vmatprep.subr.mxu0 0.0
        %1374 = vmatpush1.msra.mxu0 0.0
        %1375 = vmatprep.subr.mxu0 0.0
        %1376 = vmatpush1.msra.mxu0 0.0
        %1377 = vmatprep.subr.mxu0 0.0
        %1378 = vmatpush1.msra.mxu0 0.0
        %1379 = vmatprep.subr.mxu0 0.0
        %1380 = vmatpush1.msra.mxu0 0.0
        %1381 = vmatprep.subr.mxu0 0.0
        %1382 = vmatpush1.msra.mxu0 0.0
        %1383 = vmatprep.subr.mxu0 0.0
        %1384 = vmatpush1.msra.mxu0 0.0
        %1385 = vmatprep.subr.mxu0 0.0
        %1386 = vmatpush1.msra.mxu0 0.0
        %1387 = vmatprep.subr.mxu0 0.0
        %1388 = vmatpush1.msra.mxu0 0.0
        %1389 = vmatprep.subr.mxu0 0.0
        %1390 = vmatpush1.msra.mxu0 0.0
        %1391 = vmatprep.subr.mxu0 0.0
        %1392 = vmatpush1.msra.mxu0 0.0
        %1393 = vmatprep.subr.mxu0 0.0
        %1394 = vmatpush1.msra.mxu0 0.0
        %1395 = vmatprep.subr.mxu0 0.0
        %1396 = vmatpush1.msra.mxu0 0.0
        %1397 = vmatprep.subr.mxu0 0.0
        %1398 = vmatpush1.msra.mxu0 0.0
        %1399 = vmatprep.subr.mxu0 0.0
        %1400 = vmatpush1.msra.mxu0 0.0
        %1401 = vmatprep.mubr.f32.mxu0 0.0
        %1402 = vmatmul.mubr.f32.gmra.mrb[0].mxu0 %v1331
        %v1403 = vpop.f32.mrb[0].mxu0
        %v1404 = vadd.f32 0.0, %v1403
        %v1405 = vpop.f32.mrb[0].mxu0
        %1406 = vdwg.mxu0
        %v1407 = vld [vmem:[%s8] sm:$0xff]
        %s1408 = scalar_lea.vmem %s7, 2
        %v1409 = vld [vmem:[%s1408] sm:$0x3]
        %v1411 = vsel %vm1329, %v1409, 0
        %1413 = vmatprep.subr.mxu0 0.0
        %1414 = vmatpush1.msra.mxu0 %v1335
        %1415 = vmatprep.subr.mxu0 0.0
        %1416 = vmatpush1.msra.mxu0 0.0
        %1417 = vmatprep.subr.mxu0 0.0
        %1418 = vmatpush1.msra.mxu0 0.0
        %1419 = vmatprep.subr.mxu0 0.0
        %1420 = vmatpush1.msra.mxu0 0.0
        %1421 = vmatprep.subr.mxu0 0.0
        %1422 = vmatpush1.msra.mxu0 0.0
        %1423 = vmatprep.subr.mxu0 0.0
        %1424 = vmatpush1.msra.mxu0 0.0
        %1425 = vmatprep.subr.mxu0 0.0
        %1426 = vmatpush1.msra.mxu0 0.0
        %1427 = vmatprep.subr.mxu0 0.0
        %1428 = vmatpush1.msra.mxu0 0.0
        %1429 = vmatprep.subr.mxu0 0.0
        %1430 = vmatpush1.msra.mxu0 0.0
        %1431 = vmatprep.subr.mxu0 0.0
        %1432 = vmatpush1.msra.mxu0 0.0
        %1433 = vmatprep.subr.mxu0 0.0
        %1434 = vmatpush1.msra.mxu0 0.0
        %1435 = vmatprep.subr.mxu0 0.0
        %1436 = vmatpush1.msra.mxu0 0.0
        %1437 = vmatprep.subr.mxu0 0.0
        %1438 = vmatpush1.msra.mxu0 0.0
        %1439 = vmatprep.subr.mxu0 0.0
        %1440 = vmatpush1.msra.mxu0 0.0
        %1441 = vmatprep.subr.mxu0 0.0
        %1442 = vmatpush1.msra.mxu0 0.0
        %1443 = vmatprep.subr.mxu0 0.0
        %1444 = vmatpush1.msra.mxu0 0.0
        %1445 = vmatprep.subr.mxu0 0.0
        %1446 = vmatpush1.msra.mxu0 0.0
        %1447 = vmatprep.subr.mxu0 0.0
        %1448 = vmatpush1.msra.mxu0 0.0
        %1449 = vmatprep.subr.mxu0 0.0
        %1450 = vmatpush1.msra.mxu0 0.0
        %1451 = vmatprep.subr.mxu0 0.0
        %1452 = vmatpush1.msra.mxu0 0.0
        %1453 = vmatprep.subr.mxu0 0.0
        %1454 = vmatpush1.msra.mxu0 0.0
        %1455 = vmatprep.subr.mxu0 0.0
        %1456 = vmatpush1.msra.mxu0 0.0
        %1457 = vmatprep.subr.mxu0 0.0
        %1458 = vmatpush1.msra.mxu0 0.0
        %1459 = vmatprep.subr.mxu0 0.0
        %1460 = vmatpush1.msra.mxu0 0.0
        %1461 = vmatprep.subr.mxu0 0.0
        %1462 = vmatpush1.msra.mxu0 0.0
        %1463 = vmatprep.subr.mxu0 0.0
        %1464 = vmatpush1.msra.mxu0 0.0
        %1465 = vmatprep.subr.mxu0 0.0
        %1466 = vmatpush1.msra.mxu0 0.0
        %1467 = vmatprep.subr.mxu0 0.0
        %1468 = vmatpush1.msra.mxu0 0.0
        %1469 = vmatprep.subr.mxu0 0.0
        %1470 = vmatpush1.msra.mxu0 0.0
        %1471 = vmatprep.subr.mxu0 0.0
        %1472 = vmatpush1.msra.mxu0 0.0
        %1473 = vmatprep.subr.mxu0 0.0
        %1474 = vmatpush1.msra.mxu0 0.0
        %1475 = vmatprep.subr.mxu0 0.0
        %1476 = vmatpush1.msra.mxu0 0.0
        %1477 = vmatprep.mubr.f32.mxu0 0.0
        %1478 = vmatmul.mubr.f32.gmra.mrb[0].mxu0 %v1411
        %v1479 = vpop.f32.mrb[0].mxu0
        %v1480 = vadd.f32 0.0, %v1479
        %v1481 = vpop.f32.mrb[0].mxu0
        %1482 = vdwg.mxu0
        %s1483 = scalar_lea.vmem %s8, 8
        %v1484 = vld [vmem:[%s1483] sm:$0xff]
        %vm1485 = vcmask 64512
        %v1487 = vsel %vm1485, %v1480, 0
        %1489 = vmatprep.subr.mxu0 0.0
        %1490 = vmatpush1.msra.mxu0 %v1484
        %1491 = vmatprep.subr.mxu0 0.0
        %1492 = vmatpush1.msra.mxu0 0.0
        %1493 = vmatprep.subr.mxu0 0.0
        %1494 = vmatpush1.msra.mxu0 0.0
        %1495 = vmatprep.subr.mxu0 0.0
        %1496 = vmatpush1.msra.mxu0 0.0
        %1497 = vmatprep.subr.mxu0 0.0
        %1498 = vmatpush1.msra.mxu0 0.0
        %1499 = vmatprep.subr.mxu0 0.0
        %1500 = vmatpush1.msra.mxu0 0.0
        %1501 = vmatprep.subr.mxu0 0.0
        %1502 = vmatpush1.msra.mxu0 0.0
        %1503 = vmatprep.subr.mxu0 0.0
        %1504 = vmatpush1.msra.mxu0 0.0
        %1505 = vmatprep.subr.mxu0 0.0
        %1506 = vmatpush1.msra.mxu0 0.0
        %1507 = vmatprep.subr.mxu0 0.0
        %1508 = vmatpush1.msra.mxu0 0.0
        %1509 = vmatprep.subr.mxu0 0.0
        %1510 = vmatpush1.msra.mxu0 0.0
        %1511 = vmatprep.subr.mxu0 0.0
        %1512 = vmatpush1.msra.mxu0 0.0
        %1513 = vmatprep.subr.mxu0 0.0
        %1514 = vmatpush1.msra.mxu0 0.0
        %1515 = vmatprep.subr.mxu0 0.0
        %1516 = vmatpush1.msra.mxu0 0.0
        %1517 = vmatprep.subr.mxu0 0.0
        %1518 = vmatpush1.msra.mxu0 0.0
        %1519 = vmatprep.subr.mxu0 0.0
        %1520 = vmatpush1.msra.mxu0 0.0
        %1521 = vmatprep.subr.mxu0 0.0
        %1522 = vmatpush1.msra.mxu0 0.0
        %1523 = vmatprep.subr.mxu0 0.0
        %1524 = vmatpush1.msra.mxu0 0.0
        %1525 = vmatprep.subr.mxu0 0.0
        %1526 = vmatpush1.msra.mxu0 0.0
        %1527 = vmatprep.subr.mxu0 0.0
        %1528 = vmatpush1.msra.mxu0 0.0
        %1529 = vmatprep.subr.mxu0 0.0
        %1530 = vmatpush1.msra.mxu0 0.0
        %1531 = vmatprep.subr.mxu0 0.0
        %1532 = vmatpush1.msra.mxu0 0.0
        %1533 = vmatprep.subr.mxu0 0.0
        %1534 = vmatpush1.msra.mxu0 0.0
        %1535 = vmatprep.subr.mxu0 0.0
        %1536 = vmatpush1.msra.mxu0 0.0
        %1537 = vmatprep.subr.mxu0 0.0
        %1538 = vmatpush1.msra.mxu0 0.0
        %1539 = vmatprep.subr.mxu0 0.0
        %1540 = vmatpush1.msra.mxu0 0.0
        %1541 = vmatprep.subr.mxu0 0.0
        %1542 = vmatpush1.msra.mxu0 0.0
        %1543 = vmatprep.subr.mxu0 0.0
        %1544 = vmatpush1.msra.mxu0 0.0
        %1545 = vmatprep.subr.mxu0 0.0
        %1546 = vmatpush1.msra.mxu0 0.0
        %1547 = vmatprep.subr.mxu0 0.0
        %1548 = vmatpush1.msra.mxu0 0.0
        %1549 = vmatprep.subr.mxu0 0.0
        %1550 = vmatpush1.msra.mxu0 0.0
        %1551 = vmatprep.subr.mxu0 0.0
        %1552 = vmatpush1.msra.mxu0 0.0
        %1553 = vmatprep.mubr.f32.mxu0 0.0
        %1554 = vmatmul.mubr.f32.gmra.mrb[0].mxu0 %v1487
        %v1555 = vpop.f32.mrb[0].mxu0
        %v1556 = vadd.f32 0.0, %v1555
        %v1557 = vpop.f32.mrb[0].mxu0
        %1558 = vdwg.mxu0
        %v1560 = vsel %vm1485, %v1404, 0
        %1562 = vmatprep.subr.mxu0 0.0
        %1563 = vmatpush1.msra.mxu0 %v1407
        %1564 = vmatprep.subr.mxu0 0.0
        %1565 = vmatpush1.msra.mxu0 0.0
        %1566 = vmatprep.subr.mxu0 0.0
        %1567 = vmatpush1.msra.mxu0 0.0
        %1568 = vmatprep.subr.mxu0 0.0
        %1569 = vmatpush1.msra.mxu0 0.0
        %1570 = vmatprep.subr.mxu0 0.0
        %1571 = vmatpush1.msra.mxu0 0.0
        %1572 = vmatprep.subr.mxu0 0.0
        %1573 = vmatpush1.msra.mxu0 0.0
        %1574 = vmatprep.subr.mxu0 0.0
        %1575 = vmatpush1.msra.mxu0 0.0
        %1576 = vmatprep.subr.mxu0 0.0
        %1577 = vmatpush1.msra.mxu0 0.0
        %1578 = vmatprep.subr.mxu0 0.0
        %1579 = vmatpush1.msra.mxu0 0.0
        %1580 = vmatprep.subr.mxu0 0.0
        %1581 = vmatpush1.msra.mxu0 0.0
        %1582 = vmatprep.subr.mxu0 0.0
        %1583 = vmatpush1.msra.mxu0 0.0
        %1584 = vmatprep.subr.mxu0 0.0
        %1585 = vmatpush1.msra.mxu0 0.0
        %1586 = vmatprep.subr.mxu0 0.0
        %1587 = vmatpush1.msra.mxu0 0.0
        %1588 = vmatprep.subr.mxu0 0.0
        %1589 = vmatpush1.msra.mxu0 0.0
        %1590 = vmatprep.subr.mxu0 0.0
        %1591 = vmatpush1.msra.mxu0 0.0
        %1592 = vmatprep.subr.mxu0 0.0
        %1593 = vmatpush1.msra.mxu0 0.0
        %1594 = vmatprep.subr.mxu0 0.0
        %1595 = vmatpush1.msra.mxu0 0.0
        %1596 = vmatprep.subr.mxu0 0.0
        %1597 = vmatpush1.msra.mxu0 0.0
        %1598 = vmatprep.subr.mxu0 0.0
        %1599 = vmatpush1.msra.mxu0 0.0
        %1600 = vmatprep.subr.mxu0 0.0
        %1601 = vmatpush1.msra.mxu0 0.0
        %1602 = vmatprep.subr.mxu0 0.0
        %1603 = vmatpush1.msra.mxu0 0.0
        %1604 = vmatprep.subr.mxu0 0.0
        %1605 = vmatpush1.msra.mxu0 0.0
        %1606 = vmatprep.subr.mxu0 0.0
        %1607 = vmatpush1.msra.mxu0 0.0
        %1608 = vmatprep.subr.mxu0 0.0
        %1609 = vmatpush1.msra.mxu0 0.0
        %1610 = vmatprep.subr.mxu0 0.0
        %1611 = vmatpush1.msra.mxu0 0.0
        %1612 = vmatprep.subr.mxu0 0.0
        %1613 = vmatpush1.msra.mxu0 0.0
        %1614 = vmatprep.subr.mxu0 0.0
        %1615 = vmatpush1.msra.mxu0 0.0
        %1616 = vmatprep.subr.mxu0 0.0
        %1617 = vmatpush1.msra.mxu0 0.0
        %1618 = vmatprep.subr.mxu0 0.0
        %1619 = vmatpush1.msra.mxu0 0.0
        %1620 = vmatprep.subr.mxu0 0.0
        %1621 = vmatpush1.msra.mxu0 0.0
        %1622 = vmatprep.subr.mxu0 0.0
        %1623 = vmatpush1.msra.mxu0 0.0
        %1624 = vmatprep.subr.mxu0 0.0
        %1625 = vmatpush1.msra.mxu0 0.0
        %1626 = vmatprep.mubr.f32.mxu0 0.0
        %1627 = vmatmul.mubr.f32.gmra.mrb[0].mxu0 %v1560
        %v1628 = vpop.f32.mrb[0].mxu0
        %v1629 = vadd.f32 %v1556, %v1628
        %v1630 = vpop.f32.mrb[0].mxu0
        %1631 = vdwg.mxu0
        %s1632 = scalar_lea.vmem %s7, 4
        %v1633 = vld [vmem:[%s1632] sm:$0x3]
        %v1635 = vsel %vm1329, %v1633, 0
        %1637 = vmatprep.subr.mxu0 0.0
        %1638 = vmatpush1.msra.mxu0 %v1335
        %1639 = vmatprep.subr.mxu0 0.0
        %1640 = vmatpush1.msra.mxu0 0.0
        %1641 = vmatprep.subr.mxu0 0.0
        %1642 = vmatpush1.msra.mxu0 0.0
        %1643 = vmatprep.subr.mxu0 0.0
        %1644 = vmatpush1.msra.mxu0 0.0
        %1645 = vmatprep.subr.mxu0 0.0
        %1646 = vmatpush1.msra.mxu0 0.0
        %1647 = vmatprep.subr.mxu0 0.0
        %1648 = vmatpush1.msra.mxu0 0.0
        %1649 = vmatprep.subr.mxu0 0.0
        %1650 = vmatpush1.msra.mxu0 0.0
        %1651 = vmatprep.subr.mxu0 0.0
        %1652 = vmatpush1.msra.mxu0 0.0
        %1653 = vmatprep.subr.mxu0 0.0
        %1654 = vmatpush1.msra.mxu0 0.0
        %1655 = vmatprep.subr.mxu0 0.0
        %1656 = vmatpush1.msra.mxu0 0.0
        %1657 = vmatprep.subr.mxu0 0.0
        %1658 = vmatpush1.msra.mxu0 0.0
        %1659 = vmatprep.subr.mxu0 0.0
        %1660 = vmatpush1.msra.mxu0 0.0
        %1661 = vmatprep.subr.mxu0 0.0
        %1662 = vmatpush1.msra.mxu0 0.0
        %1663 = vmatprep.subr.mxu0 0.0
        %1664 = vmatpush1.msra.mxu0 0.0
        %1665 = vmatprep.subr.mxu0 0.0
        %1666 = vmatpush1.msra.mxu0 0.0
        %1667 = vmatprep.subr.mxu0 0.0
        %1668 = vmatpush1.msra.mxu0 0.0
        %1669 = vmatprep.subr.mxu0 0.0
        %1670 = vmatpush1.msra.mxu0 0.0
        %1671 = vmatprep.subr.mxu0 0.0
        %1672 = vmatpush1.msra.mxu0 0.0
        %1673 = vmatprep.subr.mxu0 0.0
        %1674 = vmatpush1.msra.mxu0 0.0
        %1675 = vmatprep.subr.mxu0 0.0
        %1676 = vmatpush1.msra.mxu0 0.0
        %1677 = vmatprep.subr.mxu0 0.0
        %1678 = vmatpush1.msra.mxu0 0.0
        %1679 = vmatprep.subr.mxu0 0.0
        %1680 = vmatpush1.msra.mxu0 0.0
        %1681 = vmatprep.subr.mxu0 0.0
        %1682 = vmatpush1.msra.mxu0 0.0
        %1683 = vmatprep.subr.mxu0 0.0
        %1684 = vmatpush1.msra.mxu0 0.0
        %1685 = vmatprep.subr.mxu0 0.0
        %1686 = vmatpush1.msra.mxu0 0.0
        %1687 = vmatprep.subr.mxu0 0.0
        %1688 = vmatpush1.msra.mxu0 0.0
        %1689 = vmatprep.subr.mxu0 0.0
        %1690 = vmatpush1.msra.mxu0 0.0
        %1691 = vmatprep.subr.mxu0 0.0
        %1692 = vmatpush1.msra.mxu0 0.0
        %1693 = vmatprep.subr.mxu0 0.0
        %1694 = vmatpush1.msra.mxu0 0.0
        %1695 = vmatprep.subr.mxu0 0.0
        %1696 = vmatpush1.msra.mxu0 0.0
        %1697 = vmatprep.subr.mxu0 0.0
        %1698 = vmatpush1.msra.mxu0 0.0
        %1699 = vmatprep.subr.mxu0 0.0
        %1700 = vmatpush1.msra.mxu0 0.0
        %1701 = vmatprep.mubr.f32.mxu0 0.0
        %1702 = vmatmul.mubr.f32.gmra.mrb[0].mxu0 %v1635
        %v1703 = vpop.f32.mrb[0].mxu0
        %v1704 = vadd.f32 0.0, %v1703
        %v1705 = vpop.f32.mrb[0].mxu0
        %1706 = vdwg.mxu0
        %s1707 = scalar_lea.vmem %s8, 16
        %v1708 = vld [vmem:[%s1707] sm:$0xff]
        %v1710 = vsel %vm1485, %v1704, 0
        %1712 = vmatprep.subr.mxu0 0.0
        %1713 = vmatpush1.msra.mxu0 %v1708
        %1714 = vmatprep.subr.mxu0 0.0
        %1715 = vmatpush1.msra.mxu0 0.0
        %1716 = vmatprep.subr.mxu0 0.0
        %1717 = vmatpush1.msra.mxu0 0.0
        %1718 = vmatprep.subr.mxu0 0.0
        %1719 = vmatpush1.msra.mxu0 0.0
        %1720 = vmatprep.subr.mxu0 0.0
        %1721 = vmatpush1.msra.mxu0 0.0
        %1722 = vmatprep.subr.mxu0 0.0
        %1723 = vmatpush1.msra.mxu0 0.0
        %1724 = vmatprep.subr.mxu0 0.0
        %1725 = vmatpush1.msra.mxu0 0.0
        %1726 = vmatprep.subr.mxu0 0.0
        %1727 = vmatpush1.msra.mxu0 0.0
        %1728 = vmatprep.subr.mxu0 0.0
        %1729 = vmatpush1.msra.mxu0 0.0
        %1730 = vmatprep.subr.mxu0 0.0
        %1731 = vmatpush1.msra.mxu0 0.0
        %1732 = vmatprep.subr.mxu0 0.0
        %1733 = vmatpush1.msra.mxu0 0.0
        %1734 = vmatprep.subr.mxu0 0.0
        %1735 = vmatpush1.msra.mxu0 0.0
        %1736 = vmatprep.subr.mxu0 0.0
        %1737 = vmatpush1.msra.mxu0 0.0
        %1738 = vmatprep.subr.mxu0 0.0
        %1739 = vmatpush1.msra.mxu0 0.0
        %1740 = vmatprep.subr.mxu0 0.0
        %1741 = vmatpush1.msra.mxu0 0.0
        %1742 = vmatprep.subr.mxu0 0.0
        %1743 = vmatpush1.msra.mxu0 0.0
        %1744 = vmatprep.subr.mxu0 0.0
        %1745 = vmatpush1.msra.mxu0 0.0
        %1746 = vmatprep.subr.mxu0 0.0
        %1747 = vmatpush1.msra.mxu0 0.0
        %1748 = vmatprep.subr.mxu0 0.0
        %1749 = vmatpush1.msra.mxu0 0.0
        %1750 = vmatprep.subr.mxu0 0.0
        %1751 = vmatpush1.msra.mxu0 0.0
        %1752 = vmatprep.subr.mxu0 0.0
        %1753 = vmatpush1.msra.mxu0 0.0
        %1754 = vmatprep.subr.mxu0 0.0
        %1755 = vmatpush1.msra.mxu0 0.0
        %1756 = vmatprep.subr.mxu0 0.0
        %1757 = vmatpush1.msra.mxu0 0.0
        %1758 = vmatprep.subr.mxu0 0.0
        %1759 = vmatpush1.msra.mxu0 0.0
        %1760 = vmatprep.subr.mxu0 0.0
        %1761 = vmatpush1.msra.mxu0 0.0
        %1762 = vmatprep.subr.mxu0 0.0
        %1763 = vmatpush1.msra.mxu0 0.0
        %1764 = vmatprep.subr.mxu0 0.0
        %1765 = vmatpush1.msra.mxu0 0.0
        %1766 = vmatprep.subr.mxu0 0.0
        %1767 = vmatpush1.msra.mxu0 0.0
        %1768 = vmatprep.subr.mxu0 0.0
        %1769 = vmatpush1.msra.mxu0 0.0
        %1770 = vmatprep.subr.mxu0 0.0
        %1771 = vmatpush1.msra.mxu0 0.0
        %1772 = vmatprep.subr.mxu0 0.0
        %1773 = vmatpush1.msra.mxu0 0.0
        %1774 = vmatprep.subr.mxu0 0.0
        %1775 = vmatpush1.msra.mxu0 0.0
        %1776 = vmatprep.mubr.f32.mxu0 0.0
        %1777 = vmatmul.mubr.f32.gmra.mrb[0].mxu0 %v1710
        %v1778 = vpop.f32.mrb[0].mxu0
        %v1779 = vadd.f32 0.0, %v1778
        %v1780 = vpop.f32.mrb[0].mxu0
        %1781 = vdwg.mxu0
        %v1782 = vadd.f32 %v1629, %v1779
        %v1783 = vld [vmem:[%s9] sm:$0x1]
        %v1785 = vlaneseq
        %v1786 = vshrl.u32 %v1785, 7
        %v1787 = vsub.s32 0, %v1786
        %v1788 = vrot.slane %v1783, %v1787
        %v1790 = vadd.f32 %v1782, %v1788
        %v1791 = vld [vmem:[%s10] sm:$0xff]
        %v1792 = vld [vmem:[%s10 + $0x8] sm:$0xff]
        %v1793 = vld [vmem:[%s10 + $0x10] sm:$0xff]
        %vm1794 = vcmask 15360
        %v1796 = vsel %vm1794, %v1791, 0
        %v1799 = vsel %vm1794, %v1792, 0
        %v1802 = vsel %vm1794, %v1793, 0
        %v1805 = vsel %vm1322, %v1790, 0
        %1807 = vmatprep.subr.mxu0 0.0
        %1808 = vmatpush1.msra.mxu0 %v1805
        %1809 = vmatprep.subr.mxu0 0.0
        %1810 = vmatpush1.msra.mxu0 0.0
        %1811 = vmatprep.subr.mxu0 0.0
        %1812 = vmatpush1.msra.mxu0 0.0
        %1813 = vmatprep.subr.mxu0 0.0
        %1814 = vmatpush1.msra.mxu0 0.0
        %1815 = vmatprep.subr.mxu0 0.0
        %1816 = vmatpush1.msra.mxu0 0.0
        %1817 = vmatprep.subr.mxu0 0.0
        %1818 = vmatpush1.msra.mxu0 0.0
        %1819 = vmatprep.subr.mxu0 0.0
        %1820 = vmatpush1.msra.mxu0 0.0
        %1821 = vmatprep.subr.mxu0 0.0
        %1822 = vmatpush1.msra.mxu0 0.0
        %1823 = vmatprep.subr.mxu0 0.0
        %1824 = vmatpush1.msra.mxu0 0.0
        %1825 = vmatprep.subr.mxu0 0.0
        %1826 = vmatpush1.msra.mxu0 0.0
        %1827 = vmatprep.subr.mxu0 0.0
        %1828 = vmatpush1.msra.mxu0 0.0
        %1829 = vmatprep.subr.mxu0 0.0
        %1830 = vmatpush1.msra.mxu0 0.0
        %1831 = vmatprep.subr.mxu0 0.0
        %1832 = vmatpush1.msra.mxu0 0.0
        %1833 = vmatprep.subr.mxu0 0.0
        %1834 = vmatpush1.msra.mxu0 0.0
        %1835 = vmatprep.subr.mxu0 0.0
        %1836 = vmatpush1.msra.mxu0 0.0
        %1837 = vmatprep.subr.mxu0 0.0
        %1838 = vmatpush1.msra.mxu0 0.0
        %1839 = vmatprep.subr.mxu0 0.0
        %1840 = vmatpush1.msra.mxu0 0.0
        %1841 = vmatprep.subr.mxu0 0.0
        %1842 = vmatpush1.msra.mxu0 0.0
        %1843 = vmatprep.subr.mxu0 0.0
        %1844 = vmatpush1.msra.mxu0 0.0
        %1845 = vmatprep.subr.mxu0 0.0
        %1846 = vmatpush1.msra.mxu0 0.0
        %1847 = vmatprep.subr.mxu0 0.0
        %1848 = vmatpush1.msra.mxu0 0.0
        %1849 = vmatprep.subr.mxu0 0.0
        %1850 = vmatpush1.msra.mxu0 0.0
        %1851 = vmatprep.subr.mxu0 0.0
        %1852 = vmatpush1.msra.mxu0 0.0
        %1853 = vmatprep.subr.mxu0 0.0
        %1854 = vmatpush1.msra.mxu0 0.0
        %1855 = vmatprep.subr.mxu0 0.0
        %1856 = vmatpush1.msra.mxu0 0.0
        %1857 = vmatprep.subr.mxu0 0.0
        %1858 = vmatpush1.msra.mxu0 0.0
        %1859 = vmatprep.subr.mxu0 0.0
        %1860 = vmatpush1.msra.mxu0 0.0
        %1861 = vmatprep.subr.mxu0 0.0
        %1862 = vmatpush1.msra.mxu0 0.0
        %1863 = vmatprep.subr.mxu0 0.0
        %1864 = vmatpush1.msra.mxu0 0.0
        %1865 = vmatprep.subr.mxu0 0.0
        %1866 = vmatpush1.msra.mxu0 0.0
        %1867 = vmatprep.subr.mxu0 0.0
        %1868 = vmatpush1.msra.mxu0 0.0
        %1869 = vmatprep.subr.mxu0 0.0
        %1870 = vmatpush1.msra.mxu0 0.0
        %1871 = vmatprep.mubr.f32.mxu0 0.0
        %1872 = vmatmul.mubr.f32.gmra.mrb[0].mxu0 %v1796
        %v1873 = vpop.f32.mrb[0].mxu0
        %v1874 = vadd.f32 0.0, %v1873
        %v1875 = vpop.f32.mrb[0].mxu0
        %1876 = vmatprep.mubr.f32.mxu0 0.0
        %1877 = vmatmul.mubr.f32.gmra.mrb[0].mxu0 %v1799
        %v1878 = vpop.f32.mrb[0].mxu0
        %v1879 = vadd.f32 0.0, %v1878
        %v1880 = vpop.f32.mrb[0].mxu0
        %1881 = vmatprep.mubr.f32.mxu0 0.0
        %1882 = vmatmul.mubr.f32.gmra.mrb[0].mxu0 %v1802
        %v1883 = vpop.f32.mrb[0].mxu0
        %v1884 = vadd.f32 0.0, %v1883
        %v1885 = vpop.f32.mrb[0].mxu0
        %1886 = vdwg.mxu0
        %v1887 = vld [vmem:[%s11] sm:$0xff]
        %v1888 = vld [vmem:[%s11 + $0x8] sm:$0xff]
        %v1889 = vld [vmem:[%s12] sm:$0xff]
        %v1890 = vld [vmem:[%s12 + $0x8] sm:$0xff]
        %v1891 = vld [vmem:[%s12 + $0x10] sm:$0xff]
        %v1892 = vld [vmem:[%s12 + $0x18] sm:$0xff]
        %v1893 = vld [vmem:[%s12 + $0x20] sm:$0xff]
        %v1894 = vld [vmem:[%s12 + $0x28] sm:$0xff]
        %v1895 = vld [vmem:[%s12 + $0x30] sm:$0xff]
        %v1896 = vld [vmem:[%s12 + $0x38] sm:$0xff]
        %v1897 = vld [vmem:[%s12 + $0x40] sm:$0xff]
        %v1898 = vld [vmem:[%s12 + $0x48] sm:$0xff]
        %v1899 = vld [vmem:[%s12 + $0x50] sm:$0xff]
        %v1900 = vld [vmem:[%s12 + $0x58] sm:$0xff]
        %v1901 = vld [vmem:[%s12 + $0x60] sm:$0xff]
        %v1902 = vld [vmem:[%s12 + $0x68] sm:$0xff]
        %v1903 = vld [vmem:[%s12 + $0x70] sm:$0xff]
        %v1904 = vld [vmem:[%s12 + $0x78] sm:$0xff]
        %v1905 = vld [vmem:[%s12 + $0x80] sm:$0xff]
        %v1906 = vld [vmem:[%s12 + $0x88] sm:$0xff]
        %v1907 = vld [vmem:[%s12 + $0x90] sm:$0xff]
        %v1908 = vld [vmem:[%s12 + $0x98] sm:$0xff]
        %v1909 = vld [vmem:[%s12 + $0xa0] sm:$0xff]
        %v1910 = vld [vmem:[%s12 + $0xa8] sm:$0xff]
        %v1911 = vld [vmem:[%s12 + $0xb0] sm:$0xff]
        %v1912 = vld [vmem:[%s12 + $0xb8] sm:$0xff]
        %v1914 = vsel %vm806, %v600, 0
        %v1917 = vsel %vm806, %v605, 0
        %v1920 = vsel %vm806, %v610, 0
        %1922 = vmatprep.subr.mxu0 %v1890
        %1923 = vmatpush1.msra.mxu0 %v1889
        %1924 = vmatprep.subr.mxu0 %v1892
        %1925 = vmatpush1.msra.mxu0 %v1891
        %1926 = vmatprep.subr.mxu0 %v1894
        %1927 = vmatpush1.msra.mxu0 %v1893
        %1928 = vmatprep.subr.mxu0 %v1896
        %1929 = vmatpush1.msra.mxu0 %v1895
        %1930 = vmatprep.subr.mxu0 %v1898
        %1931 = vmatpush1.msra.mxu0 %v1897
        %1932 = vmatprep.subr.mxu0 %v1900
        %1933 = vmatpush1.msra.mxu0 %v1899
        %1934 = vmatprep.subr.mxu0 %v1902
        %1935 = vmatpush1.msra.mxu0 %v1901
        %1936 = vmatprep.subr.mxu0 %v1904
        %1937 = vmatpush1.msra.mxu0 %v1903
        %1938 = vmatprep.subr.mxu0 %v1906
        %1939 = vmatpush1.msra.mxu0 %v1905
        %1940 = vmatprep.subr.mxu0 %v1908
        %1941 = vmatpush1.msra.mxu0 %v1907
        %1942 = vmatprep.subr.mxu0 %v1910
        %1943 = vmatpush1.msra.mxu0 %v1909
        %1944 = vmatprep.subr.mxu0 %v1912
        %1945 = vmatpush1.msra.mxu0 %v1911
        %1946 = vmatprep.subr.mxu0 0.0
        %1947 = vmatpush1.msra.mxu0 0.0
        %1948 = vmatprep.subr.mxu0 0.0
        %1949 = vmatpush1.msra.mxu0 0.0
        %1950 = vmatprep.subr.mxu0 0.0
        %1951 = vmatpush1.msra.mxu0 0.0
        %1952 = vmatprep.subr.mxu0 0.0
        %1953 = vmatpush1.msra.mxu0 0.0
        %1954 = vmatprep.subr.mxu0 0.0
        %1955 = vmatpush1.msra.mxu0 0.0
        %1956 = vmatprep.subr.mxu0 0.0
        %1957 = vmatpush1.msra.mxu0 0.0
        %1958 = vmatprep.subr.mxu0 0.0
        %1959 = vmatpush1.msra.mxu0 0.0
        %1960 = vmatprep.subr.mxu0 0.0
        %1961 = vmatpush1.msra.mxu0 0.0
        %1962 = vmatprep.subr.mxu0 0.0
        %1963 = vmatpush1.msra.mxu0 0.0
        %1964 = vmatprep.subr.mxu0 0.0
        %1965 = vmatpush1.msra.mxu0 0.0
        %1966 = vmatprep.subr.mxu0 0.0
        %1967 = vmatpush1.msra.mxu0 0.0
        %1968 = vmatprep.subr.mxu0 0.0
        %1969 = vmatpush1.msra.mxu0 0.0
        %1970 = vmatprep.subr.mxu0 0.0
        %1971 = vmatpush1.msra.mxu0 0.0
        %1972 = vmatprep.subr.mxu0 0.0
        %1973 = vmatpush1.msra.mxu0 0.0
        %1974 = vmatprep.subr.mxu0 0.0
        %1975 = vmatpush1.msra.mxu0 0.0
        %1976 = vmatprep.subr.mxu0 0.0
        %1977 = vmatpush1.msra.mxu0 0.0
        %1978 = vmatprep.subr.mxu0 0.0
        %1979 = vmatpush1.msra.mxu0 0.0
        %1980 = vmatprep.subr.mxu0 0.0
        %1981 = vmatpush1.msra.mxu0 0.0
        %1982 = vmatprep.subr.mxu0 0.0
        %1983 = vmatpush1.msra.mxu0 0.0
        %1984 = vmatprep.subr.mxu0 0.0
        %1985 = vmatpush1.msra.mxu0 0.0
        %1986 = vmatprep.mubr.f32.mxu0 0.0
        %1987 = vmatmul.mubr.f32.gmra.mrb[0].mxu0 %v1914
        %v1988 = vpop.f32.mrb[0].mxu0
        %v1989 = vadd.f32 0.0, %v1988
        %v1990 = vpop.f32.mrb[0].mxu0
        %v1991 = vadd.f32 0.0, %v1990
        %1992 = vmatprep.mubr.f32.mxu0 0.0
        %1993 = vmatmul.mubr.f32.gmra.mrb[0].mxu0 %v1917
        %v1994 = vpop.f32.mrb[0].mxu0
        %v1995 = vadd.f32 0.0, %v1994
        %v1996 = vpop.f32.mrb[0].mxu0
        %v1997 = vadd.f32 0.0, %v1996
        %1998 = vmatprep.mubr.f32.mxu0 0.0
        %1999 = vmatmul.mubr.f32.gmra.mrb[0].mxu0 %v1920
        %v2000 = vpop.f32.mrb[0].mxu0
        %v2001 = vadd.f32 0.0, %v2000
        %v2002 = vpop.f32.mrb[0].mxu0
        %v2003 = vadd.f32 0.0, %v2002
        %2004 = vdwg.mxu0
        %v2006 = vsel %vm1485, %v1874, 0
        %v2009 = vsel %vm1485, %v1879, 0
        %v2012 = vsel %vm1485, %v1884, 0
        %2014 = vmatprep.subr.mxu0 %v1888
        %2015 = vmatpush1.msra.mxu0 %v1887
        %2016 = vmatprep.subr.mxu0 0.0
        %2017 = vmatpush1.msra.mxu0 0.0
        %2018 = vmatprep.subr.mxu0 0.0
        %2019 = vmatpush1.msra.mxu0 0.0
        %2020 = vmatprep.subr.mxu0 0.0
        %2021 = vmatpush1.msra.mxu0 0.0
        %2022 = vmatprep.subr.mxu0 0.0
        %2023 = vmatpush1.msra.mxu0 0.0
        %2024 = vmatprep.subr.mxu0 0.0
        %2025 = vmatpush1.msra.mxu0 0.0
        %2026 = vmatprep.subr.mxu0 0.0
        %2027 = vmatpush1.msra.mxu0 0.0
        %2028 = vmatprep.subr.mxu0 0.0
        %2029 = vmatpush1.msra.mxu0 0.0
        %2030 = vmatprep.subr.mxu0 0.0
        %2031 = vmatpush1.msra.mxu0 0.0
        %2032 = vmatprep.subr.mxu0 0.0
        %2033 = vmatpush1.msra.mxu0 0.0
        %2034 = vmatprep.subr.mxu0 0.0
        %2035 = vmatpush1.msra.mxu0 0.0
        %2036 = vmatprep.subr.mxu0 0.0
        %2037 = vmatpush1.msra.mxu0 0.0
        %2038 = vmatprep.subr.mxu0 0.0
        %2039 = vmatpush1.msra.mxu0 0.0
        %2040 = vmatprep.subr.mxu0 0.0
        %2041 = vmatpush1.msra.mxu0 0.0
        %2042 = vmatprep.subr.mxu0 0.0
        %2043 = vmatpush1.msra.mxu0 0.0
        %2044 = vmatprep.subr.mxu0 0.0
        %2045 = vmatpush1.msra.mxu0 0.0
        %2046 = vmatprep.subr.mxu0 0.0
        %2047 = vmatpush1.msra.mxu0 0.0
        %2048 = vmatprep.subr.mxu0 0.0
        %2049 = vmatpush1.msra.mxu0 0.0
        %2050 = vmatprep.subr.mxu0 0.0
        %2051 = vmatpush1.msra.mxu0 0.0
        %2052 = vmatprep.subr.mxu0 0.0
        %2053 = vmatpush1.msra.mxu0 0.0
        %2054 = vmatprep.subr.mxu0 0.0
        %2055 = vmatpush1.msra.mxu0 0.0
        %2056 = vmatprep.subr.mxu0 0.0
        %2057 = vmatpush1.msra.mxu0 0.0
        %2058 = vmatprep.subr.mxu0 0.0
        %2059 = vmatpush1.msra.mxu0 0.0
        %2060 = vmatprep.subr.mxu0 0.0
        %2061 = vmatpush1.msra.mxu0 0.0
        %2062 = vmatprep.subr.mxu0 0.0
        %2063 = vmatpush1.msra.mxu0 0.0
        %2064 = vmatprep.subr.mxu0 0.0
        %2065 = vmatpush1.msra.mxu0 0.0
        %2066 = vmatprep.subr.mxu0 0.0
        %2067 = vmatpush1.msra.mxu0 0.0
        %2068 = vmatprep.subr.mxu0 0.0
        %2069 = vmatpush1.msra.mxu0 0.0
        %2070 = vmatprep.subr.mxu0 0.0
        %2071 = vmatpush1.msra.mxu0 0.0
        %2072 = vmatprep.subr.mxu0 0.0
        %2073 = vmatpush1.msra.mxu0 0.0
        %2074 = vmatprep.subr.mxu0 0.0
        %2075 = vmatpush1.msra.mxu0 0.0
        %2076 = vmatprep.subr.mxu0 0.0
        %2077 = vmatpush1.msra.mxu0 0.0
        %2078 = vmatprep.mubr.f32.mxu0 0.0
        %2079 = vmatmul.mubr.f32.gmra.mrb[0].mxu0 %v2006
        %v2080 = vpop.f32.mrb[0].mxu0
        %v2081 = vadd.f32 %v1989, %v2080
        %v2082 = vpop.f32.mrb[0].mxu0
        %v2083 = vadd.f32 %v1991, %v2082
        %2084 = vmatprep.mubr.f32.mxu0 0.0
        %2085 = vmatmul.mubr.f32.gmra.mrb[0].mxu0 %v2009
        %v2086 = vpop.f32.mrb[0].mxu0
        %v2087 = vadd.f32 %v1995, %v2086
        %v2088 = vpop.f32.mrb[0].mxu0
        %v2089 = vadd.f32 %v1997, %v2088
        %2090 = vmatprep.mubr.f32.mxu0 0.0
        %2091 = vmatmul.mubr.f32.gmra.mrb[0].mxu0 %v2012
        %v2092 = vpop.f32.mrb[0].mxu0
        %v2093 = vadd.f32 %v2001, %v2092
        %v2094 = vpop.f32.mrb[0].mxu0
        %v2095 = vadd.f32 %v2003, %v2094
        %2096 = vdwg.mxu0
        %v2097 = vld [vmem:[%s13] sm:$0x3]
        %v2099 = vlaneseq
        %v2100 = vshrl.u32 %v2099, 7
        %v2101 = vsub.s32 0, %v2100
        %v2102 = vrot.slane %v2097, %v2101
        %v2103 = vlaneseq
        %v2104 = vshrl.u32 %v2103, 7
        %v2105 = vsub.s32 1, %v2104
        %v2106 = vrot.slane %v2097, %v2105
        %v2109 = vadd.f32 %v2081, %v2102
        %v2110 = vadd.f32 %v2083, %v2106
        %v2111 = vadd.f32 %v2087, %v2102
        %v2112 = vadd.f32 %v2089, %v2106
        %v2113 = vadd.f32 %v2093, %v2102
        %v2114 = vadd.f32 %v2095, %v2106
        %v2115 = vxor.u32 %v2109, 2147483648
        %v2116 = vxor.u32 %v2110, 2147483648
        %v2117 = vxor.u32 %v2111, 2147483648
        %v2118 = vxor.u32 %v2112, 2147483648
        %v2119 = vxor.u32 %v2113, 2147483648
        %v2120 = vxor.u32 %v2114, 2147483648
        %v2121 = vmul.f32 %v2115, 1.442695
        %v2122 = vpow.pop %v2121
        %v2123 = vmul.f32 %v2116, 1.442695
        %v2124 = vpow.pop %v2123
        %v2125 = vmul.f32 %v2117, 1.442695
        %v2126 = vpow.pop %v2125
        %v2127 = vmul.f32 %v2118, 1.442695
        %v2128 = vpow.pop %v2127
        %v2129 = vmul.f32 %v2119, 1.442695
        %v2130 = vpow.pop %v2129
        %v2131 = vmul.f32 %v2120, 1.442695
        %v2132 = vpow.pop %v2131
        %v2133 = vadd.f32 %v2122, 1.0
        %v2134 = vadd.f32 %v2124, 1.0
        %v2135 = vadd.f32 %v2126, 1.0
        %v2136 = vadd.f32 %v2128, 1.0
        %v2137 = vadd.f32 %v2130, 1.0
        %v2138 = vadd.f32 %v2132, 1.0
        %v2139 = vrcp.pop %v2133
        %v2140 = vmul.f32 1.0, %v2139
        %v2141 = vrcp.pop %v2134
        %v2142 = vmul.f32 1.0, %v2141
        %v2143 = vrcp.pop %v2135
        %v2144 = vmul.f32 1.0, %v2143
        %v2145 = vrcp.pop %v2136
        %v2146 = vmul.f32 1.0, %v2145
        %v2147 = vrcp.pop %v2137
        %v2148 = vmul.f32 1.0, %v2147
        %v2149 = vrcp.pop %v2138
        %v2150 = vmul.f32 1.0, %v2149
        %v2151 = vmul.f32 %v486, %v2140
        %v2152 = vmul.f32 %v487, %v2142
        %v2153 = vmul.f32 %v488, %v2144
        %v2154 = vmul.f32 %v489, %v2146
        %v2155 = vmul.f32 %v490, %v2148
        %v2156 = vmul.f32 %v491, %v2150
        %2157 = vst [vmem:[%s485] sm:$0xff] %v2151
        %2158 = vst.msk [vmem:[%s485 + $0x8] sm:$0xff] %vm523, %v2152
        %2159 = vst [vmem:[%s485 + $0x10] sm:$0xff] %v2153
        %2160 = vst.msk [vmem:[%s485 + $0x18] sm:$0xff] %vm523, %v2154
        %2161 = vst [vmem:[%s485 + $0x20] sm:$0xff] %v2155
        %2162 = vst.msk [vmem:[%s485 + $0x28] sm:$0xff] %vm523, %v2156
        %s2163 = sand.u32 %s338, 1
        %s2164 = scalar_lea.sflag [#allocation4], %s2163
        %s2165 = sand.u32 %s338, 1
        %s2166 = smul.addr %s2165, 48
        %s2167 = scalar_lea.vmem [#allocation5], %s2166
        // Predicated region
        $region81: #{tpu_custom_call.1} parent=75 // pred_check
          %p2168 = pneg %p348
        $region82: #{tpu_custom_call.1} parent=75 // pred_check_branch
          %2170 = sbr.rel (%p2168) target = $region84
        $region83: #{tpu_custom_call.1} parent=75 // pred_region
          %s2172 = ssub.s32 768, 768
          %2173 = vsyncadd %s2164, %s2172
          %s2174 = smul.addr %s31, 6
          %s2175 = smul.addr %s2174, 128
          %s2176 = scalar_lea.hbm %s14, %s2175
          %s2177 = sshll.u32 %s2167, 4
          %s2178 = int_to_ptr.vmem [resolvable:$true] %s2177
          %2183 = dma.vmem_to_hbm [thread:$0]  %s2178, 768, %s2176, %s2164, 256, 256, 16
        $region84: #{tpu_custom_call.1} parent=75 // pred_fallthru
          _
      $region76: #{tpu_custom_call.1} parent=5 // pred_fallthru
        _
      %p2184 = scmp.le.s32.totalorder 2, %s26
      // Predicated region
      $region85: #{tpu_custom_call.1} parent=5 // pred_check
        %p2185 = pneg %p2184
      $region86: #{tpu_custom_call.1} parent=5 // pred_check_branch
        %2187 = sbr.rel (%p2185) target = $region88
      $region87: #{tpu_custom_call.1} parent=5 // pred_region
        %s2188 = ssub.s32 %s26, 2
        // Predicated region
        $region89: #{tpu_custom_call.1} parent=87 // pred_check
          %p2189 = pneg %p354
        $region90: #{tpu_custom_call.1} parent=87 // pred_check_branch
          %2191 = sbr.rel (%p2189) target = $region92
        $region91: #{tpu_custom_call.1} parent=87 // pred_region
          %s2192 = sand.u32 %s339, 1
          %s2193 = scalar_lea.sflag [#allocation4], %s2192
          %s2194 = sand.u32 %s339, 1
          %s2195 = smul.addr %s2194, 48
          %s2196 = scalar_lea.vmem [#allocation5], %s2195
          %2197 = dma.done %s2193, 768
        $region92: #{tpu_custom_call.1} parent=87 // pred_fallthru
          _
      $region88: #{tpu_custom_call.1} parent=5 // pred_fallthru
        _
    $region6: #{tpu_custom_call.1} parent=1 // loop_footer
      %s30 = sadd.s32 1, %s26
    $region7: #{tpu_custom_call.1} parent=1 // loop_footer_branch
      %25 = sbr.rel target = $region3
    $region8: #{tpu_custom_call.1} parent=1 // loop_exit
      _
    %2198 = vsyncpa [#allocation3], 1
    %s2199 = scalar_lea.sflag [#allocation3], 1
    %2200 = vsyncpa %s2199, 1
    %2201 = vsyncpa [#allocation4], 1
    %s2202 = scalar_lea.sflag [#allocation4], 1
    %2203 = vsyncpa %s2202, 1

</llo_original>
